<compile_context>
chip_gen: v5e
topology: v5e:2x2
jax: 0.10.0
libtpu: 0.0.40
codegen_flags: <defaults>
</compile_context>

<pallas_src>
import jax
import jax.numpy as jnp
from jax.experimental import pallas as pl
from jax.experimental.pallas import tpu as pltpu


def relu_conv1x1_kernel(w_ref, x_ref, o_ref):
    # w_ref: (Co, C)   x_ref: (1, C, HW)   o_ref: (1, Co, HW)
    x = jnp.maximum(x_ref[0], 0.0)                        # ReLU (VPU)
    o_ref[0] = jnp.dot(
        w_ref[...], x, preferred_element_type=jnp.float32
    ).astype(o_ref.dtype)                                 # 1x1 conv == matmul (MXU)


def relu_conv2d_1x1(x_nchw, w_oihw, *, compute_dtype=None):
    """ReLU followed by 1x1 conv (stride 1, no bias). NCHW in / NCHW out."""
    N, C, H, W = x_nchw.shape
    Co, Ci, kh, kw = w_oihw.shape
    assert (Ci, kh, kw) == (C, 1, 1)
    HW = H * W
    out_dtype = x_nchw.dtype

    # Free views — contiguous reshapes, no HBM data movement.
    x3d = x_nchw.reshape(N, C, HW)
    w2d = w_oihw.reshape(Co, Ci)

    if compute_dtype is not None:  # e.g. jnp.bfloat16 on v6e/v7x to halve DMA
        x3d = x3d.astype(compute_dtype)
        w2d = w2d.astype(compute_dtype)

    cost = pl.CostEstimate(
        flops=2 * N * HW * C * Co,
        transcendentals=0,
        bytes_accessed=(x3d.size * x3d.dtype.itemsize
                        + w2d.size * w2d.dtype.itemsize
                        + N * Co * HW * jnp.dtype(out_dtype).itemsize),
    )

    out3d = pl.pallas_call(
        relu_conv1x1_kernel,
        out_shape=jax.ShapeDtypeStruct((N, Co, HW), out_dtype),
        grid=(N,),
        in_specs=[
            pl.BlockSpec((Co, C), lambda n: (0, 0)),        # weight resident in VMEM
            pl.BlockSpec((1, C, HW), lambda n: (n, 0, 0)),  # one image per grid step
        ],
        out_specs=pl.BlockSpec((1, Co, HW), lambda n: (n, 0, 0)),
        cost_estimate=cost,
        compiler_params=pltpu.CompilerParams(
            dimension_semantics=("parallel",),
        ),
    )(w2d, x3d)

    # (N, Co, H*W) -> NCHW, free reshape.
    return out3d.reshape(N, Co, H, W)


if __name__ == "__main__":
    key = jax.random.PRNGKey(0)
    kx, kw = jax.random.split(key)

    # Shapes implied by the module: Conv2d(896, 128, kernel=1, bias=False)
    N, C_in, H, W = 1, 896, 14, 14
    C_out = 128

    x = jax.random.normal(kx, (N, C_in, H, W), dtype=jnp.float32)
    # deterministic weight init (kaiming-uniform-like scale)
    bound = 1.0 / (C_in ** 0.5)
    w = jax.random.uniform(
        kw, (C_out, C_in, 1, 1), dtype=jnp.float32, minval=-bound, maxval=bound
    )

    out = jax.block_until_ready(relu_conv2d_1x1(x, w))

    # sanity check against plain-JAX reference
    ref = jnp.einsum(
        "nchw,oc->nohw", jnp.maximum(x, 0.0), w.reshape(C_out, C_in)
    )
    assert out.shape == (N, C_out, H, W)
    assert jnp.allclose(out, ref, atol=1e-4, rtol=1e-4)

    print("KERNEL_OK")
</pallas_src>

<mosaic_0001>
module attributes {stable_mosaic.version = 11 : i64} {
  func.func @relu_conv1x1_kernel(%arg0: i32, %arg1: memref<128x896xf32, #tpu.memory_space<vmem>>, %arg2: memref<1x896x196xf32, #tpu.memory_space<vmem>>, %arg3: memref<1x128x196xf32, #tpu.memory_space<vmem>>) attributes {dimension_semantics = [#tpu.dimension_semantics<parallel>], iteration_bounds = array<i64: 1>, scalar_prefetch = 0 : i64, scratch_operands = 0 : i64, tpu.core_type = #tpu.core_type<tc>, window_params = [{pipeline_mode = #tpu.pipeline_mode<synchronous>, transform_indices = @transform_0, window_bounds = array<i64: 128, 896>}, {transform_indices = @transform_1, window_bounds = array<i64: 1, 896, 196>}, {transform_indices = @transform_2, window_bounds = array<i64: 1, 128, 196>}]} {
    %c0 = arith.constant 0 : index
    %c0_0 = arith.constant 0 : index
    %c0_1 = arith.constant 0 : index
    %0 = vector.load %arg2[%c0, %c0_0, %c0_1] : memref<1x896x196xf32, #tpu.memory_space<vmem>>, vector<1x896x196xf32>
    %1 = vector.shape_cast %0 : vector<1x896x196xf32> to vector<896x196xf32>
    %cst = arith.constant 0.000000e+00 : f32
    %2 = vector.broadcast %cst : f32 to vector<896x196xf32>
    %3 = arith.maximumf %1, %2 : vector<896x196xf32>
    %c0_2 = arith.constant 0 : index
    %c0_3 = arith.constant 0 : index
    %4 = vector.load %arg1[%c0_2, %c0_3] : memref<128x896xf32, #tpu.memory_space<vmem>>, vector<128x896xf32>
    %cst_4 = arith.constant dense<0.000000e+00> : vector<128x196xf32>
    %5 = tpu.matmul %4, %3, %cst_4 {dimension_numbers = #tpu.dot_dimension_numbers<[1], [0], [0], [1], [0, 0, 1, 1], [], []>} : vector<128x896xf32>, vector<896x196xf32>, vector<128x196xf32> -> vector<128x196xf32>
    %c0_5 = arith.constant 0 : index
    %c0_6 = arith.constant 0 : index
    %c0_7 = arith.constant 0 : index
    %6 = vector.load %arg3[%c0_5, %c0_6, %c0_7] : memref<1x128x196xf32, #tpu.memory_space<vmem>>, vector<1x128x196xf32>
    %7 = vector.shape_cast %6 : vector<1x128x196xf32> to vector<128x196xf32>
    %8 = vector.shape_cast %5 : vector<128x196xf32> to vector<1x128x196xf32>
    tpu.vector_store %arg3[%c0_5, %c0_6, %c0_7], %8 {strides = array<i32>} : memref<1x128x196xf32, #tpu.memory_space<vmem>>, vector<1x128x196xf32>,
    return
  }
  func.func @transform_0(%arg0: i32) -> (i32, i32) {
    %c0_i32 = arith.constant 0 : i32
    %c0_i32_0 = arith.constant 0 : i32
    %c0_i32_1 = arith.constant 0 : i32
    return %c0_i32, %c0_i32_0 : i32, i32
  }
  func.func @transform_1(%arg0: i32) -> (i32, i32, i32) {
    %c0_i32 = arith.constant 0 : i32
    %c0_i32_0 = arith.constant 0 : i32
    %c0_i32_1 = arith.constant 0 : i32
    return %arg0, %c0_i32, %c0_i32_0 : i32, i32, i32
  }
  func.func @transform_2(%arg0: i32) -> (i32, i32, i32) {
    %c0_i32 = arith.constant 0 : i32
    %c0_i32_0 = arith.constant 0 : i32
    %c0_i32_1 = arith.constant 0 : i32
    return %arg0, %c0_i32, %c0_i32_0 : i32, i32, i32
  }
}

</mosaic_0001>

<llo_original>
// kernel: tpu_custom_call.1
$region0: #{tpu_custom_call.1}
  #allocation0 [shape = 'u32[]', space=smem, size = 0x4, offset = 0x4, fixed_abs, tag = 'smem constant byte address 0x4 - core index']
  #allocation1 [shape = 'u32[72,128]{1,0:T(1,128)}', space=vmem, size = 0x9000, scoped, tag = 'internal scratch']
  %s0 = inlined_call_operand.vmem [shape: f32[128,896], index: 0, kind: input, shape index: {}]
  %s1 = inlined_call_operand.vmem [shape: f32[1,896,196], index: 1, kind: input, shape index: {}]
  %s2 = inlined_call_operand.vmem [shape: f32[1,128,196], index: 2, kind: output, shape index: {}]
  %s3 = sld [smem:[#allocation0]]
  $region18: #{tpu_custom_call.1} parent=0
    _
  %s5 = ssub.s32 1, %s3
  %s6 = scalar_select 0, %s5, %s3
  // Predicated region
  $region2: #{tpu_custom_call.1} parent=0 // pred_check
    _
  $region3: #{tpu_custom_call.1} parent=0 // pred_check_branch
    %8 = sbr.rel (0) target = $region5
  $region4: #{tpu_custom_call.1} parent=0 // pred_region
    _
  $region5: #{tpu_custom_call.1} parent=0 // pred_fallthru
    _
  // Predicated region
  $region6: #{tpu_custom_call.1} parent=0 // pred_check
    _
  $region7: #{tpu_custom_call.1} parent=0 // pred_check_branch
    %10 = sbr.rel (0) target = $region9
  $region8: #{tpu_custom_call.1} parent=0 // pred_region
    _
  $region9: #{tpu_custom_call.1} parent=0 // pred_fallthru
    _
  %v11 = vld [vmem:[%s1] sm:$0xff]
  %v12 = vld [vmem:[%s1 + $0x8] sm:$0xff]
  %v13 = vld [vmem:[%s1 + $0x10] sm:$0xff]
  %v14 = vld [vmem:[%s1 + $0x18] sm:$0xff]
  %v15 = vld [vmem:[%s1 + $0x20] sm:$0xff]
  %v16 = vld [vmem:[%s1 + $0x28] sm:$0xff]
  %v17 = vld [vmem:[%s1 + $0x30] sm:$0xff]
  %v18 = vld [vmem:[%s1 + $0x38] sm:$0xff]
  %v19 = vld [vmem:[%s1 + $0x40] sm:$0xff]
  %v20 = vld [vmem:[%s1 + $0x48] sm:$0xff]
  %v21 = vld [vmem:[%s1 + $0x50] sm:$0xff]
  %v22 = vld [vmem:[%s1 + $0x58] sm:$0xff]
  %v23 = vld [vmem:[%s1 + $0x60] sm:$0xff]
  %v24 = vld [vmem:[%s1 + $0x68] sm:$0xff]
  %v25 = vld [vmem:[%s1 + $0x70] sm:$0xff]
  %v26 = vld [vmem:[%s1 + $0x78] sm:$0xff]
  %v27 = vld [vmem:[%s1 + $0x80] sm:$0xff]
  %v28 = vld [vmem:[%s1 + $0x88] sm:$0xff]
  %v29 = vld [vmem:[%s1 + $0x90] sm:$0xff]
  %v30 = vld [vmem:[%s1 + $0x98] sm:$0xff]
  %v31 = vld [vmem:[%s1 + $0xa0] sm:$0xff]
  %v32 = vld [vmem:[%s1 + $0xa8] sm:$0xff]
  %v33 = vld [vmem:[%s1 + $0xb0] sm:$0xff]
  %v34 = vld [vmem:[%s1 + $0xb8] sm:$0xff]
  %v35 = vld [vmem:[%s1 + $0xc0] sm:$0xff]
  %v36 = vld [vmem:[%s1 + $0xc8] sm:$0xff]
  %v37 = vld [vmem:[%s1 + $0xd0] sm:$0xff]
  %v38 = vld [vmem:[%s1 + $0xd8] sm:$0xff]
  %v39 = vld [vmem:[%s1 + $0xe0] sm:$0xff]
  %v40 = vld [vmem:[%s1 + $0xe8] sm:$0xff]
  %v41 = vld [vmem:[%s1 + $0xf0] sm:$0xff]
  %v42 = vld [vmem:[%s1 + $0xf8] sm:$0xff]
  %v43 = vld [vmem:[%s1 + $0x100] sm:$0xff]
  %v44 = vld [vmem:[%s1 + $0x108] sm:$0xff]
  %v45 = vld [vmem:[%s1 + $0x110] sm:$0xff]
  %v46 = vld [vmem:[%s1 + $0x118] sm:$0xff]
  %v47 = vld [vmem:[%s1 + $0x120] sm:$0xff]
  %v48 = vld [vmem:[%s1 + $0x128] sm:$0xff]
  %v49 = vld [vmem:[%s1 + $0x130] sm:$0xff]
  %v50 = vld [vmem:[%s1 + $0x138] sm:$0xff]
  %v51 = vld [vmem:[%s1 + $0x140] sm:$0xff]
  %v52 = vld [vmem:[%s1 + $0x148] sm:$0xff]
  %v53 = vld [vmem:[%s1 + $0x150] sm:$0xff]
  %v54 = vld [vmem:[%s1 + $0x158] sm:$0xff]
  %v55 = vld [vmem:[%s1 + $0x160] sm:$0xff]
  %v56 = vld [vmem:[%s1 + $0x168] sm:$0xff]
  %v57 = vld [vmem:[%s1 + $0x170] sm:$0xff]
  %v58 = vld [vmem:[%s1 + $0x178] sm:$0xff]
  %v59 = vld [vmem:[%s1 + $0x180] sm:$0xff]
  %v60 = vld [vmem:[%s1 + $0x188] sm:$0xff]
  %v61 = vld [vmem:[%s1 + $0x190] sm:$0xff]
  %v62 = vld [vmem:[%s1 + $0x198] sm:$0xff]
  %v63 = vld [vmem:[%s1 + $0x1a0] sm:$0xff]
  %v64 = vld [vmem:[%s1 + $0x1a8] sm:$0xff]
  %v65 = vld [vmem:[%s1 + $0x1b0] sm:$0xff]
  %v66 = vld [vmem:[%s1 + $0x1b8] sm:$0xff]
  %v67 = vld [vmem:[%s1 + $0x1c0] sm:$0xff]
  %v68 = vld [vmem:[%s1 + $0x1c8] sm:$0xff]
  %v69 = vld [vmem:[%s1 + $0x1d0] sm:$0xff]
  %v70 = vld [vmem:[%s1 + $0x1d8] sm:$0xff]
  %v71 = vld [vmem:[%s1 + $0x1e0] sm:$0xff]
  %v72 = vld [vmem:[%s1 + $0x1e8] sm:$0xff]
  %v73 = vld [vmem:[%s1 + $0x1f0] sm:$0xff]
  %v74 = vld [vmem:[%s1 + $0x1f8] sm:$0xff]
  %v75 = vld [vmem:[%s1 + $0x200] sm:$0xff]
  %v76 = vld [vmem:[%s1 + $0x208] sm:$0xff]
  %v77 = vld [vmem:[%s1 + $0x210] sm:$0xff]
  %v78 = vld [vmem:[%s1 + $0x218] sm:$0xff]
  %v79 = vld [vmem:[%s1 + $0x220] sm:$0xff]
  %v80 = vld [vmem:[%s1 + $0x228] sm:$0xff]
  %v81 = vld [vmem:[%s1 + $0x230] sm:$0xff]
  %v82 = vld [vmem:[%s1 + $0x238] sm:$0xff]
  %v83 = vld [vmem:[%s1 + $0x240] sm:$0xff]
  %v84 = vld [vmem:[%s1 + $0x248] sm:$0xff]
  %v85 = vld [vmem:[%s1 + $0x250] sm:$0xff]
  %v86 = vld [vmem:[%s1 + $0x258] sm:$0xff]
  %v87 = vld [vmem:[%s1 + $0x260] sm:$0xff]
  %v88 = vld [vmem:[%s1 + $0x268] sm:$0xff]
  %v89 = vld [vmem:[%s1 + $0x270] sm:$0xff]
  %v90 = vld [vmem:[%s1 + $0x278] sm:$0xff]
  %v91 = vld [vmem:[%s1 + $0x280] sm:$0xff]
  %v92 = vld [vmem:[%s1 + $0x288] sm:$0xff]
  %v93 = vld [vmem:[%s1 + $0x290] sm:$0xff]
  %v94 = vld [vmem:[%s1 + $0x298] sm:$0xff]
  %v95 = vld [vmem:[%s1 + $0x2a0] sm:$0xff]
  %v96 = vld [vmem:[%s1 + $0x2a8] sm:$0xff]
  %v97 = vld [vmem:[%s1 + $0x2b0] sm:$0xff]
  %v98 = vld [vmem:[%s1 + $0x2b8] sm:$0xff]
  %v99 = vld [vmem:[%s1 + $0x2c0] sm:$0xff]
  %v100 = vld [vmem:[%s1 + $0x2c8] sm:$0xff]
  %v101 = vld [vmem:[%s1 + $0x2d0] sm:$0xff]
  %v102 = vld [vmem:[%s1 + $0x2d8] sm:$0xff]
  %v103 = vld [vmem:[%s1 + $0x2e0] sm:$0xff]
  %v104 = vld [vmem:[%s1 + $0x2e8] sm:$0xff]
  %v105 = vld [vmem:[%s1 + $0x2f0] sm:$0xff]
  %v106 = vld [vmem:[%s1 + $0x2f8] sm:$0xff]
  %v107 = vld [vmem:[%s1 + $0x300] sm:$0xff]
  %v108 = vld [vmem:[%s1 + $0x308] sm:$0xff]
  %v109 = vld [vmem:[%s1 + $0x310] sm:$0xff]
  %v110 = vld [vmem:[%s1 + $0x318] sm:$0xff]
  %v111 = vld [vmem:[%s1 + $0x320] sm:$0xff]
  %v112 = vld [vmem:[%s1 + $0x328] sm:$0xff]
  %v113 = vld [vmem:[%s1 + $0x330] sm:$0xff]
  %v114 = vld [vmem:[%s1 + $0x338] sm:$0xff]
  %v115 = vld [vmem:[%s1 + $0x340] sm:$0xff]
  %v116 = vld [vmem:[%s1 + $0x348] sm:$0xff]
  %v117 = vld [vmem:[%s1 + $0x350] sm:$0xff]
  %v118 = vld [vmem:[%s1 + $0x358] sm:$0xff]
  %v119 = vld [vmem:[%s1 + $0x360] sm:$0xff]
  %v120 = vld [vmem:[%s1 + $0x368] sm:$0xff]
  %v121 = vld [vmem:[%s1 + $0x370] sm:$0xff]
  %v122 = vld [vmem:[%s1 + $0x378] sm:$0xff]
  %v123 = vld [vmem:[%s1 + $0x380] sm:$0xff]
  %v124 = vld [vmem:[%s1 + $0x388] sm:$0xff]
  %v125 = vld [vmem:[%s1 + $0x390] sm:$0xff]
  %v126 = vld [vmem:[%s1 + $0x398] sm:$0xff]
  %v127 = vld [vmem:[%s1 + $0x3a0] sm:$0xff]
  %v128 = vld [vmem:[%s1 + $0x3a8] sm:$0xff]
  %v129 = vld [vmem:[%s1 + $0x3b0] sm:$0xff]
  %v130 = vld [vmem:[%s1 + $0x3b8] sm:$0xff]
  %v131 = vld [vmem:[%s1 + $0x3c0] sm:$0xff]
  %v132 = vld [vmem:[%s1 + $0x3c8] sm:$0xff]
  %v133 = vld [vmem:[%s1 + $0x3d0] sm:$0xff]
  %v134 = vld [vmem:[%s1 + $0x3d8] sm:$0xff]
  %v135 = vld [vmem:[%s1 + $0x3e0] sm:$0xff]
  %v136 = vld [vmem:[%s1 + $0x3e8] sm:$0xff]
  %v137 = vld [vmem:[%s1 + $0x3f0] sm:$0xff]
  %v138 = vld [vmem:[%s1 + $0x3f8] sm:$0xff]
  %v139 = vld [vmem:[%s1 + $0x400] sm:$0xff]
  %v140 = vld [vmem:[%s1 + $0x408] sm:$0xff]
  %v141 = vld [vmem:[%s1 + $0x410] sm:$0xff]
  %v142 = vld [vmem:[%s1 + $0x418] sm:$0xff]
  %v143 = vld [vmem:[%s1 + $0x420] sm:$0xff]
  %v144 = vld [vmem:[%s1 + $0x428] sm:$0xff]
  %v145 = vld [vmem:[%s1 + $0x430] sm:$0xff]
  %v146 = vld [vmem:[%s1 + $0x438] sm:$0xff]
  %v147 = vld [vmem:[%s1 + $0x440] sm:$0xff]
  %v148 = vld [vmem:[%s1 + $0x448] sm:$0xff]
  %v149 = vld [vmem:[%s1 + $0x450] sm:$0xff]
  %v150 = vld [vmem:[%s1 + $0x458] sm:$0xff]
  %v151 = vld [vmem:[%s1 + $0x460] sm:$0xff]
  %v152 = vld [vmem:[%s1 + $0x468] sm:$0xff]
  %v153 = vld [vmem:[%s1 + $0x470] sm:$0xff]
  %v154 = vld [vmem:[%s1 + $0x478] sm:$0xff]
  %v155 = vld [vmem:[%s1 + $0x480] sm:$0xff]
  %v156 = vld [vmem:[%s1 + $0x488] sm:$0xff]
  %v157 = vld [vmem:[%s1 + $0x490] sm:$0xff]
  %v158 = vld [vmem:[%s1 + $0x498] sm:$0xff]
  %v159 = vld [vmem:[%s1 + $0x4a0] sm:$0xff]
  %v160 = vld [vmem:[%s1 + $0x4a8] sm:$0xff]
  %v161 = vld [vmem:[%s1 + $0x4b0] sm:$0xff]
  %v162 = vld [vmem:[%s1 + $0x4b8] sm:$0xff]
  %v163 = vld [vmem:[%s1 + $0x4c0] sm:$0xff]
  %v164 = vld [vmem:[%s1 + $0x4c8] sm:$0xff]
  %v165 = vld [vmem:[%s1 + $0x4d0] sm:$0xff]
  %v166 = vld [vmem:[%s1 + $0x4d8] sm:$0xff]
  %v167 = vld [vmem:[%s1 + $0x4e0] sm:$0xff]
  %v168 = vld [vmem:[%s1 + $0x4e8] sm:$0xff]
  %v169 = vld [vmem:[%s1 + $0x4f0] sm:$0xff]
  %v170 = vld [vmem:[%s1 + $0x4f8] sm:$0xff]
  %v171 = vld [vmem:[%s1 + $0x500] sm:$0xff]
  %v172 = vld [vmem:[%s1 + $0x508] sm:$0xff]
  %v173 = vld [vmem:[%s1 + $0x510] sm:$0xff]
  %v174 = vld [vmem:[%s1 + $0x518] sm:$0xff]
  %v175 = vld [vmem:[%s1 + $0x520] sm:$0xff]
  %v176 = vld [vmem:[%s1 + $0x528] sm:$0xff]
  %v177 = vld [vmem:[%s1 + $0x530] sm:$0xff]
  %v178 = vld [vmem:[%s1 + $0x538] sm:$0xff]
  %v179 = vld [vmem:[%s1 + $0x540] sm:$0xff]
  %v180 = vld [vmem:[%s1 + $0x548] sm:$0xff]
  %v181 = vld [vmem:[%s1 + $0x550] sm:$0xff]
  %v182 = vld [vmem:[%s1 + $0x558] sm:$0xff]
  %v183 = vld [vmem:[%s1 + $0x560] sm:$0xff]
  %v184 = vld [vmem:[%s1 + $0x568] sm:$0xff]
  %v185 = vld [vmem:[%s1 + $0x570] sm:$0xff]
  %v186 = vld [vmem:[%s1 + $0x578] sm:$0xff]
  %v187 = vld [vmem:[%s1 + $0x580] sm:$0xff]
  %v188 = vld [vmem:[%s1 + $0x588] sm:$0xff]
  %v189 = vld [vmem:[%s1 + $0x590] sm:$0xff]
  %v190 = vld [vmem:[%s1 + $0x598] sm:$0xff]
  %v191 = vld [vmem:[%s1 + $0x5a0] sm:$0xff]
  %v192 = vld [vmem:[%s1 + $0x5a8] sm:$0xff]
  %v193 = vld [vmem:[%s1 + $0x5b0] sm:$0xff]
  %v194 = vld [vmem:[%s1 + $0x5b8] sm:$0xff]
  %v195 = vld [vmem:[%s1 + $0x5c0] sm:$0xff]
  %v196 = vld [vmem:[%s1 + $0x5c8] sm:$0xff]
  %v197 = vld [vmem:[%s1 + $0x5d0] sm:$0xff]
  %v198 = vld [vmem:[%s1 + $0x5d8] sm:$0xff]
  %v199 = vld [vmem:[%s1 + $0x5e0] sm:$0xff]
  %v200 = vld [vmem:[%s1 + $0x5e8] sm:$0xff]
  %v201 = vld [vmem:[%s1 + $0x5f0] sm:$0xff]
  %v202 = vld [vmem:[%s1 + $0x5f8] sm:$0xff]
  %v203 = vld [vmem:[%s1 + $0x600] sm:$0xff]
  %v204 = vld [vmem:[%s1 + $0x608] sm:$0xff]
  %v205 = vld [vmem:[%s1 + $0x610] sm:$0xff]
  %v206 = vld [vmem:[%s1 + $0x618] sm:$0xff]
  %v207 = vld [vmem:[%s1 + $0x620] sm:$0xff]
  %v208 = vld [vmem:[%s1 + $0x628] sm:$0xff]
  %v209 = vld [vmem:[%s1 + $0x630] sm:$0xff]
  %v210 = vld [vmem:[%s1 + $0x638] sm:$0xff]
  %v211 = vld [vmem:[%s1 + $0x640] sm:$0xff]
  %v212 = vld [vmem:[%s1 + $0x648] sm:$0xff]
  %v213 = vld [vmem:[%s1 + $0x650] sm:$0xff]
  %v214 = vld [vmem:[%s1 + $0x658] sm:$0xff]
  %v215 = vld [vmem:[%s1 + $0x660] sm:$0xff]
  %v216 = vld [vmem:[%s1 + $0x668] sm:$0xff]
  %v217 = vld [vmem:[%s1 + $0x670] sm:$0xff]
  %v218 = vld [vmem:[%s1 + $0x678] sm:$0xff]
  %v219 = vld [vmem:[%s1 + $0x680] sm:$0xff]
  %v220 = vld [vmem:[%s1 + $0x688] sm:$0xff]
  %v221 = vld [vmem:[%s1 + $0x690] sm:$0xff]
  %v222 = vld [vmem:[%s1 + $0x698] sm:$0xff]
  %v223 = vld [vmem:[%s1 + $0x6a0] sm:$0xff]
  %v224 = vld [vmem:[%s1 + $0x6a8] sm:$0xff]
  %v225 = vld [vmem:[%s1 + $0x6b0] sm:$0xff]
  %v226 = vld [vmem:[%s1 + $0x6b8] sm:$0xff]
  %v227 = vld [vmem:[%s1 + $0x6c0] sm:$0xff]
  %v228 = vld [vmem:[%s1 + $0x6c8] sm:$0xff]
  %v229 = vld [vmem:[%s1 + $0x6d0] sm:$0xff]
  %v230 = vld [vmem:[%s1 + $0x6d8] sm:$0xff]
  %v231 = vld [vmem:[%s1 + $0x6e0] sm:$0xff]
  %v232 = vld [vmem:[%s1 + $0x6e8] sm:$0xff]
  %v233 = vld [vmem:[%s1 + $0x6f0] sm:$0xff]
  %v234 = vld [vmem:[%s1 + $0x6f8] sm:$0xff]
  %v235 = vmax.f32 %v11, 0.0
  %v236 = vmax.f32 %v12, 0.0
  %v237 = vmax.f32 %v13, 0.0
  %v238 = vmax.f32 %v14, 0.0
  %v239 = vmax.f32 %v15, 0.0
  %v240 = vmax.f32 %v16, 0.0
  %v241 = vmax.f32 %v17, 0.0
  %v242 = vmax.f32 %v18, 0.0
  %v243 = vmax.f32 %v19, 0.0
  %v244 = vmax.f32 %v20, 0.0
  %v245 = vmax.f32 %v21, 0.0
  %v246 = vmax.f32 %v22, 0.0
  %v247 = vmax.f32 %v23, 0.0
  %v248 = vmax.f32 %v24, 0.0
  %v249 = vmax.f32 %v25, 0.0
  %v250 = vmax.f32 %v26, 0.0
  %v251 = vmax.f32 %v27, 0.0
  %v252 = vmax.f32 %v28, 0.0
  %v253 = vmax.f32 %v29, 0.0
  %v254 = vmax.f32 %v30, 0.0
  %v255 = vmax.f32 %v31, 0.0
  %v256 = vmax.f32 %v32, 0.0
  %v257 = vmax.f32 %v33, 0.0
  %v258 = vmax.f32 %v34, 0.0
  %v259 = vmax.f32 %v35, 0.0
  %v260 = vmax.f32 %v36, 0.0
  %v261 = vmax.f32 %v37, 0.0
  %v262 = vmax.f32 %v38, 0.0
  %v263 = vmax.f32 %v39, 0.0
  %v264 = vmax.f32 %v40, 0.0
  %v265 = vmax.f32 %v41, 0.0
  %v266 = vmax.f32 %v42, 0.0
  %v267 = vmax.f32 %v43, 0.0
  %v268 = vmax.f32 %v44, 0.0
  %v269 = vmax.f32 %v45, 0.0
  %v270 = vmax.f32 %v46, 0.0
  %v271 = vmax.f32 %v47, 0.0
  %v272 = vmax.f32 %v48, 0.0
  %v273 = vmax.f32 %v49, 0.0
  %v274 = vmax.f32 %v50, 0.0
  %v275 = vmax.f32 %v51, 0.0
  %v276 = vmax.f32 %v52, 0.0
  %v277 = vmax.f32 %v53, 0.0
  %v278 = vmax.f32 %v54, 0.0
  %v279 = vmax.f32 %v55, 0.0
  %v280 = vmax.f32 %v56, 0.0
  %v281 = vmax.f32 %v57, 0.0
  %v282 = vmax.f32 %v58, 0.0
  %v283 = vmax.f32 %v59, 0.0
  %v284 = vmax.f32 %v60, 0.0
  %v285 = vmax.f32 %v61, 0.0
  %v286 = vmax.f32 %v62, 0.0
  %v287 = vmax.f32 %v63, 0.0
  %v288 = vmax.f32 %v64, 0.0
  %v289 = vmax.f32 %v65, 0.0
  %v290 = vmax.f32 %v66, 0.0
  %v291 = vmax.f32 %v67, 0.0
  %v292 = vmax.f32 %v68, 0.0
  %v293 = vmax.f32 %v69, 0.0
  %v294 = vmax.f32 %v70, 0.0
  %v295 = vmax.f32 %v71, 0.0
  %v296 = vmax.f32 %v72, 0.0
  %v297 = vmax.f32 %v73, 0.0
  %v298 = vmax.f32 %v74, 0.0
  %v299 = vmax.f32 %v75, 0.0
  %v300 = vmax.f32 %v76, 0.0
  %v301 = vmax.f32 %v77, 0.0
  %v302 = vmax.f32 %v78, 0.0
  %v303 = vmax.f32 %v79, 0.0
  %v304 = vmax.f32 %v80, 0.0
  %v305 = vmax.f32 %v81, 0.0
  %v306 = vmax.f32 %v82, 0.0
  %v307 = vmax.f32 %v83, 0.0
  %v308 = vmax.f32 %v84, 0.0
  %v309 = vmax.f32 %v85, 0.0
  %v310 = vmax.f32 %v86, 0.0
  %v311 = vmax.f32 %v87, 0.0
  %v312 = vmax.f32 %v88, 0.0
  %v313 = vmax.f32 %v89, 0.0
  %v314 = vmax.f32 %v90, 0.0
  %v315 = vmax.f32 %v91, 0.0
  %v316 = vmax.f32 %v92, 0.0
  %v317 = vmax.f32 %v93, 0.0
  %v318 = vmax.f32 %v94, 0.0
  %v319 = vmax.f32 %v95, 0.0
  %v320 = vmax.f32 %v96, 0.0
  %v321 = vmax.f32 %v97, 0.0
  %v322 = vmax.f32 %v98, 0.0
  %v323 = vmax.f32 %v99, 0.0
  %v324 = vmax.f32 %v100, 0.0
  %v325 = vmax.f32 %v101, 0.0
  %v326 = vmax.f32 %v102, 0.0
  %v327 = vmax.f32 %v103, 0.0
  %v328 = vmax.f32 %v104, 0.0
  %v329 = vmax.f32 %v105, 0.0
  %v330 = vmax.f32 %v106, 0.0
  %v331 = vmax.f32 %v107, 0.0
  %v332 = vmax.f32 %v108, 0.0
  %v333 = vmax.f32 %v109, 0.0
  %v334 = vmax.f32 %v110, 0.0
  %v335 = vmax.f32 %v111, 0.0
  %v336 = vmax.f32 %v112, 0.0
  %v337 = vmax.f32 %v113, 0.0
  %v338 = vmax.f32 %v114, 0.0
  %v339 = vmax.f32 %v115, 0.0
  %v340 = vmax.f32 %v116, 0.0
  %v341 = vmax.f32 %v117, 0.0
  %v342 = vmax.f32 %v118, 0.0
  %v343 = vmax.f32 %v119, 0.0
  %v344 = vmax.f32 %v120, 0.0
  %v345 = vmax.f32 %v121, 0.0
  %v346 = vmax.f32 %v122, 0.0
  %v347 = vmax.f32 %v123, 0.0
  %v348 = vmax.f32 %v124, 0.0
  %v349 = vmax.f32 %v125, 0.0
  %v350 = vmax.f32 %v126, 0.0
  %v351 = vmax.f32 %v127, 0.0
  %v352 = vmax.f32 %v128, 0.0
  %v353 = vmax.f32 %v129, 0.0
  %v354 = vmax.f32 %v130, 0.0
  %v355 = vmax.f32 %v131, 0.0
  %v356 = vmax.f32 %v132, 0.0
  %v357 = vmax.f32 %v133, 0.0
  %v358 = vmax.f32 %v134, 0.0
  %v359 = vmax.f32 %v135, 0.0
  %v360 = vmax.f32 %v136, 0.0
  %v361 = vmax.f32 %v137, 0.0
  %v362 = vmax.f32 %v138, 0.0
  %v363 = vmax.f32 %v139, 0.0
  %v364 = vmax.f32 %v140, 0.0
  %v365 = vmax.f32 %v141, 0.0
  %v366 = vmax.f32 %v142, 0.0
  %v367 = vmax.f32 %v143, 0.0
  %v368 = vmax.f32 %v144, 0.0
  %v369 = vmax.f32 %v145, 0.0
  %v370 = vmax.f32 %v146, 0.0
  %v371 = vmax.f32 %v147, 0.0
  %v372 = vmax.f32 %v148, 0.0
  %v373 = vmax.f32 %v149, 0.0
  %v374 = vmax.f32 %v150, 0.0
  %v375 = vmax.f32 %v151, 0.0
  %v376 = vmax.f32 %v152, 0.0
  %v377 = vmax.f32 %v153, 0.0
  %v378 = vmax.f32 %v154, 0.0
  %v379 = vmax.f32 %v155, 0.0
  %v380 = vmax.f32 %v156, 0.0
  %v381 = vmax.f32 %v157, 0.0
  %v382 = vmax.f32 %v158, 0.0
  %v383 = vmax.f32 %v159, 0.0
  %v384 = vmax.f32 %v160, 0.0
  %v385 = vmax.f32 %v161, 0.0
  %v386 = vmax.f32 %v162, 0.0
  %v387 = vmax.f32 %v163, 0.0
  %v388 = vmax.f32 %v164, 0.0
  %v389 = vmax.f32 %v165, 0.0
  %v390 = vmax.f32 %v166, 0.0
  %v391 = vmax.f32 %v167, 0.0
  %v392 = vmax.f32 %v168, 0.0
  %v393 = vmax.f32 %v169, 0.0
  %v394 = vmax.f32 %v170, 0.0
  %v395 = vmax.f32 %v171, 0.0
  %v396 = vmax.f32 %v172, 0.0
  %v397 = vmax.f32 %v173, 0.0
  %v398 = vmax.f32 %v174, 0.0
  %v399 = vmax.f32 %v175, 0.0
  %v400 = vmax.f32 %v176, 0.0
  %v401 = vmax.f32 %v177, 0.0
  %v402 = vmax.f32 %v178, 0.0
  %v403 = vmax.f32 %v179, 0.0
  %v404 = vmax.f32 %v180, 0.0
  %v405 = vmax.f32 %v181, 0.0
  %v406 = vmax.f32 %v182, 0.0
  %v407 = vmax.f32 %v183, 0.0
  %v408 = vmax.f32 %v184, 0.0
  %v409 = vmax.f32 %v185, 0.0
  %v410 = vmax.f32 %v186, 0.0
  %v411 = vmax.f32 %v187, 0.0
  %v412 = vmax.f32 %v188, 0.0
  %v413 = vmax.f32 %v189, 0.0
  %v414 = vmax.f32 %v190, 0.0
  %v415 = vmax.f32 %v191, 0.0
  %v416 = vmax.f32 %v192, 0.0
  %v417 = vmax.f32 %v193, 0.0
  %v418 = vmax.f32 %v194, 0.0
  %v419 = vmax.f32 %v195, 0.0
  %v420 = vmax.f32 %v196, 0.0
  %v421 = vmax.f32 %v197, 0.0
  %v422 = vmax.f32 %v198, 0.0
  %v423 = vmax.f32 %v199, 0.0
  %v424 = vmax.f32 %v200, 0.0
  %v425 = vmax.f32 %v201, 0.0
  %v426 = vmax.f32 %v202, 0.0
  %v427 = vmax.f32 %v203, 0.0
  %v428 = vmax.f32 %v204, 0.0
  %v429 = vmax.f32 %v205, 0.0
  %v430 = vmax.f32 %v206, 0.0
  %v431 = vmax.f32 %v207, 0.0
  %v432 = vmax.f32 %v208, 0.0
  %v433 = vmax.f32 %v209, 0.0
  %v434 = vmax.f32 %v210, 0.0
  %v435 = vmax.f32 %v211, 0.0
  %v436 = vmax.f32 %v212, 0.0
  %v437 = vmax.f32 %v213, 0.0
  %v438 = vmax.f32 %v214, 0.0
  %v439 = vmax.f32 %v215, 0.0
  %v440 = vmax.f32 %v216, 0.0
  %v441 = vmax.f32 %v217, 0.0
  %v442 = vmax.f32 %v218, 0.0
  %v443 = vmax.f32 %v219, 0.0
  %v444 = vmax.f32 %v220, 0.0
  %v445 = vmax.f32 %v221, 0.0
  %v446 = vmax.f32 %v222, 0.0
  %v447 = vmax.f32 %v223, 0.0
  %v448 = vmax.f32 %v224, 0.0
  %v449 = vmax.f32 %v225, 0.0
  %v450 = vmax.f32 %v226, 0.0
  %v451 = vmax.f32 %v227, 0.0
  %v452 = vmax.f32 %v228, 0.0
  %v453 = vmax.f32 %v229, 0.0
  %v454 = vmax.f32 %v230, 0.0
  %v455 = vmax.f32 %v231, 0.0
  %v456 = vmax.f32 %v232, 0.0
  %v457 = vmax.f32 %v233, 0.0
  %v458 = vmax.f32 %v234, 0.0
  %v459 = vld [vmem:[%s0] sm:$0xff]
  %v460 = vld [vmem:[%s0 + $0x8] sm:$0xff]
  %v461 = vld [vmem:[%s0 + $0x10] sm:$0xff]
  %v462 = vld [vmem:[%s0 + $0x18] sm:$0xff]
  %v463 = vld [vmem:[%s0 + $0x20] sm:$0xff]
  %v464 = vld [vmem:[%s0 + $0x28] sm:$0xff]
  %v465 = vld [vmem:[%s0 + $0x30] sm:$0xff]
  %v466 = vld [vmem:[%s0 + $0x38] sm:$0xff]
  %v467 = vld [vmem:[%s0 + $0x40] sm:$0xff]
  %v468 = vld [vmem:[%s0 + $0x48] sm:$0xff]
  %v469 = vld [vmem:[%s0 + $0x50] sm:$0xff]
  %v470 = vld [vmem:[%s0 + $0x58] sm:$0xff]
  %v471 = vld [vmem:[%s0 + $0x60] sm:$0xff]
  %v472 = vld [vmem:[%s0 + $0x68] sm:$0xff]
  %v473 = vld [vmem:[%s0 + $0x70] sm:$0xff]
  %v474 = vld [vmem:[%s0 + $0x78] sm:$0xff]
  %v475 = vld [vmem:[%s0 + $0x80] sm:$0xff]
  %v476 = vld [vmem:[%s0 + $0x88] sm:$0xff]
  %v477 = vld [vmem:[%s0 + $0x90] sm:$0xff]
  %v478 = vld [vmem:[%s0 + $0x98] sm:$0xff]
  %v479 = vld [vmem:[%s0 + $0xa0] sm:$0xff]
  %v480 = vld [vmem:[%s0 + $0xa8] sm:$0xff]
  %v481 = vld [vmem:[%s0 + $0xb0] sm:$0xff]
  %v482 = vld [vmem:[%s0 + $0xb8] sm:$0xff]
  %v483 = vld [vmem:[%s0 + $0xc0] sm:$0xff]
  %v484 = vld [vmem:[%s0 + $0xc8] sm:$0xff]
  %v485 = vld [vmem:[%s0 + $0xd0] sm:$0xff]
  %v486 = vld [vmem:[%s0 + $0xd8] sm:$0xff]
  %v487 = vld [vmem:[%s0 + $0xe0] sm:$0xff]
  %v488 = vld [vmem:[%s0 + $0xe8] sm:$0xff]
  %v489 = vld [vmem:[%s0 + $0xf0] sm:$0xff]
  %v490 = vld [vmem:[%s0 + $0xf8] sm:$0xff]
  %v491 = vld [vmem:[%s0 + $0x100] sm:$0xff]
  %v492 = vld [vmem:[%s0 + $0x108] sm:$0xff]
  %v493 = vld [vmem:[%s0 + $0x110] sm:$0xff]
  %v494 = vld [vmem:[%s0 + $0x118] sm:$0xff]
  %v495 = vld [vmem:[%s0 + $0x120] sm:$0xff]
  %v496 = vld [vmem:[%s0 + $0x128] sm:$0xff]
  %v497 = vld [vmem:[%s0 + $0x130] sm:$0xff]
  %v498 = vld [vmem:[%s0 + $0x138] sm:$0xff]
  %v499 = vld [vmem:[%s0 + $0x140] sm:$0xff]
  %v500 = vld [vmem:[%s0 + $0x148] sm:$0xff]
  %v501 = vld [vmem:[%s0 + $0x150] sm:$0xff]
  %v502 = vld [vmem:[%s0 + $0x158] sm:$0xff]
  %v503 = vld [vmem:[%s0 + $0x160] sm:$0xff]
  %v504 = vld [vmem:[%s0 + $0x168] sm:$0xff]
  %v505 = vld [vmem:[%s0 + $0x170] sm:$0xff]
  %v506 = vld [vmem:[%s0 + $0x178] sm:$0xff]
  %v507 = vld [vmem:[%s0 + $0x180] sm:$0xff]
  %v508 = vld [vmem:[%s0 + $0x188] sm:$0xff]
  %v509 = vld [vmem:[%s0 + $0x190] sm:$0xff]
  %v510 = vld [vmem:[%s0 + $0x198] sm:$0xff]
  %v511 = vld [vmem:[%s0 + $0x1a0] sm:$0xff]
  %v512 = vld [vmem:[%s0 + $0x1a8] sm:$0xff]
  %v513 = vld [vmem:[%s0 + $0x1b0] sm:$0xff]
  %v514 = vld [vmem:[%s0 + $0x1b8] sm:$0xff]
  %v515 = vld [vmem:[%s0 + $0x1c0] sm:$0xff]
  %v516 = vld [vmem:[%s0 + $0x1c8] sm:$0xff]
  %v517 = vld [vmem:[%s0 + $0x1d0] sm:$0xff]
  %v518 = vld [vmem:[%s0 + $0x1d8] sm:$0xff]
  %v519 = vld [vmem:[%s0 + $0x1e0] sm:$0xff]
  %v520 = vld [vmem:[%s0 + $0x1e8] sm:$0xff]
  %v521 = vld [vmem:[%s0 + $0x1f0] sm:$0xff]
  %v522 = vld [vmem:[%s0 + $0x1f8] sm:$0xff]
  %v523 = vld [vmem:[%s0 + $0x200] sm:$0xff]
  %v524 = vld [vmem:[%s0 + $0x208] sm:$0xff]
  %v525 = vld [vmem:[%s0 + $0x210] sm:$0xff]
  %v526 = vld [vmem:[%s0 + $0x218] sm:$0xff]
  %v527 = vld [vmem:[%s0 + $0x220] sm:$0xff]
  %v528 = vld [vmem:[%s0 + $0x228] sm:$0xff]
  %v529 = vld [vmem:[%s0 + $0x230] sm:$0xff]
  %v530 = vld [vmem:[%s0 + $0x238] sm:$0xff]
  %v531 = vld [vmem:[%s0 + $0x240] sm:$0xff]
  %v532 = vld [vmem:[%s0 + $0x248] sm:$0xff]
  %v533 = vld [vmem:[%s0 + $0x250] sm:$0xff]
  %v534 = vld [vmem:[%s0 + $0x258] sm:$0xff]
  %v535 = vld [vmem:[%s0 + $0x260] sm:$0xff]
  %v536 = vld [vmem:[%s0 + $0x268] sm:$0xff]
  %v537 = vld [vmem:[%s0 + $0x270] sm:$0xff]
  %v538 = vld [vmem:[%s0 + $0x278] sm:$0xff]
  %v539 = vld [vmem:[%s0 + $0x280] sm:$0xff]
  %v540 = vld [vmem:[%s0 + $0x288] sm:$0xff]
  %v541 = vld [vmem:[%s0 + $0x290] sm:$0xff]
  %v542 = vld [vmem:[%s0 + $0x298] sm:$0xff]
  %v543 = vld [vmem:[%s0 + $0x2a0] sm:$0xff]
  %v544 = vld [vmem:[%s0 + $0x2a8] sm:$0xff]
  %v545 = vld [vmem:[%s0 + $0x2b0] sm:$0xff]
  %v546 = vld [vmem:[%s0 + $0x2b8] sm:$0xff]
  %v547 = vld [vmem:[%s0 + $0x2c0] sm:$0xff]
  %v548 = vld [vmem:[%s0 + $0x2c8] sm:$0xff]
  %v549 = vld [vmem:[%s0 + $0x2d0] sm:$0xff]
  %v550 = vld [vmem:[%s0 + $0x2d8] sm:$0xff]
  %v551 = vld [vmem:[%s0 + $0x2e0] sm:$0xff]
  %v552 = vld [vmem:[%s0 + $0x2e8] sm:$0xff]
  %v553 = vld [vmem:[%s0 + $0x2f0] sm:$0xff]
  %v554 = vld [vmem:[%s0 + $0x2f8] sm:$0xff]
  %v555 = vld [vmem:[%s0 + $0x300] sm:$0xff]
  %v556 = vld [vmem:[%s0 + $0x308] sm:$0xff]
  %v557 = vld [vmem:[%s0 + $0x310] sm:$0xff]
  %v558 = vld [vmem:[%s0 + $0x318] sm:$0xff]
  %v559 = vld [vmem:[%s0 + $0x320] sm:$0xff]
  %v560 = vld [vmem:[%s0 + $0x328] sm:$0xff]
  %v561 = vld [vmem:[%s0 + $0x330] sm:$0xff]
  %v562 = vld [vmem:[%s0 + $0x338] sm:$0xff]
  %v563 = vld [vmem:[%s0 + $0x340] sm:$0xff]
  %v564 = vld [vmem:[%s0 + $0x348] sm:$0xff]
  %v565 = vld [vmem:[%s0 + $0x350] sm:$0xff]
  %v566 = vld [vmem:[%s0 + $0x358] sm:$0xff]
  %v567 = vld [vmem:[%s0 + $0x360] sm:$0xff]
  %v568 = vld [vmem:[%s0 + $0x368] sm:$0xff]
  %v569 = vld [vmem:[%s0 + $0x370] sm:$0xff]
  %v570 = vld [vmem:[%s0 + $0x378] sm:$0xff]
  %571 = vmatpush.msra.mxu0 %v265
  %572 = vmatpush.msra.mxu0 %v263
  %573 = vmatpush.msra.mxu0 %v261
  %574 = vmatpush.msra.mxu0 %v259
  %575 = vmatpush.msra.mxu0 %v257
  %576 = vmatpush.msra.mxu0 %v255
  %577 = vmatpush.msra.mxu0 %v253
  %578 = vmatpush.msra.mxu0 %v251
  %579 = vmatpush.msra.mxu0 %v249
  %580 = vmatpush.msra.mxu0 %v247
  %581 = vmatpush.msra.mxu0 %v245
  %582 = vmatpush.msra.mxu0 %v243
  %583 = vmatpush.msra.mxu0 %v241
  %584 = vmatpush.msra.mxu0 %v239
  %585 = vmatpush.msra.mxu0 %v237
  %586 = vmatpush.msra.mxu0 %v235
  %587 = vmatmul.f32.gmra.mxu0 %v459
  %v588 = vpop.f32.mrf.mxu0
  %v589 = vadd.f32 0.0, %v588
  %590 = vmatmul.f32.gmra.mxu0 %v466
  %v591 = vpop.f32.mrf.mxu0
  %v592 = vadd.f32 0.0, %v591
  %593 = vmatmul.f32.gmra.mxu0 %v473
  %v594 = vpop.f32.mrf.mxu0
  %v595 = vadd.f32 0.0, %v594
  %596 = vmatmul.f32.gmra.mxu0 %v480
  %v597 = vpop.f32.mrf.mxu0
  %v598 = vadd.f32 0.0, %v597
  %599 = vmatmul.f32.gmra.mxu0 %v487
  %v600 = vpop.f32.mrf.mxu0
  %v601 = vadd.f32 0.0, %v600
  %602 = vmatmul.f32.gmra.mxu0 %v494
  %v603 = vpop.f32.mrf.mxu0
  %v604 = vadd.f32 0.0, %v603
  %605 = vmatmul.f32.gmra.mxu0 %v501
  %v606 = vpop.f32.mrf.mxu0
  %v607 = vadd.f32 0.0, %v606
  %608 = vmatmul.f32.gmra.mxu0 %v508
  %v609 = vpop.f32.mrf.mxu0
  %v610 = vadd.f32 0.0, %v609
  %611 = vmatmul.f32.gmra.mxu0 %v515
  %v612 = vpop.f32.mrf.mxu0
  %v613 = vadd.f32 0.0, %v612
  %614 = vmatmul.f32.gmra.mxu0 %v522
  %v615 = vpop.f32.mrf.mxu0
  %v616 = vadd.f32 0.0, %v615
  %617 = vmatmul.f32.gmra.mxu0 %v529
  %v618 = vpop.f32.mrf.mxu0
  %v619 = vadd.f32 0.0, %v618
  %620 = vmatmul.f32.gmra.mxu0 %v536
  %v621 = vpop.f32.mrf.mxu0
  %v622 = vadd.f32 0.0, %v621
  %623 = vmatmul.f32.gmra.mxu0 %v543
  %v624 = vpop.f32.mrf.mxu0
  %v625 = vadd.f32 0.0, %v624
  %626 = vmatmul.f32.gmra.mxu0 %v550
  %v627 = vpop.f32.mrf.mxu0
  %v628 = vadd.f32 0.0, %v627
  %629 = vmatmul.f32.gmra.mxu0 %v557
  %v630 = vpop.f32.mrf.mxu0
  %v631 = vadd.f32 0.0, %v630
  %632 = vmatmul.f32.gmra.mxu0 %v564
  %v633 = vpop.f32.mrf.mxu0
  %v634 = vadd.f32 0.0, %v633
  %635 = vdwg.mxu0
  %636 = vmatpush.msra.mxu0 %v297
  %637 = vmatpush.msra.mxu0 %v295
  %638 = vmatpush.msra.mxu0 %v293
  %639 = vmatpush.msra.mxu0 %v291
  %640 = vmatpush.msra.mxu0 %v289
  %641 = vmatpush.msra.mxu0 %v287
  %642 = vmatpush.msra.mxu0 %v285
  %643 = vmatpush.msra.mxu0 %v283
  %644 = vmatpush.msra.mxu0 %v281
  %645 = vmatpush.msra.mxu0 %v279
  %646 = vmatpush.msra.mxu0 %v277
  %647 = vmatpush.msra.mxu0 %v275
  %648 = vmatpush.msra.mxu0 %v273
  %649 = vmatpush.msra.mxu0 %v271
  %650 = vmatpush.msra.mxu0 %v269
  %651 = vmatpush.msra.mxu0 %v267
  %652 = vmatmul.f32.gmra.mxu0 %v460
  %v653 = vpop.f32.mrf.mxu0
  %v654 = vadd.f32 %v589, %v653
  %655 = vmatmul.f32.gmra.mxu0 %v467
  %v656 = vpop.f32.mrf.mxu0
  %v657 = vadd.f32 %v592, %v656
  %658 = vmatmul.f32.gmra.mxu0 %v474
  %v659 = vpop.f32.mrf.mxu0
  %v660 = vadd.f32 %v595, %v659
  %661 = vmatmul.f32.gmra.mxu0 %v481
  %v662 = vpop.f32.mrf.mxu0
  %v663 = vadd.f32 %v598, %v662
  %664 = vmatmul.f32.gmra.mxu0 %v488
  %v665 = vpop.f32.mrf.mxu0
  %v666 = vadd.f32 %v601, %v665
  %667 = vmatmul.f32.gmra.mxu0 %v495
  %v668 = vpop.f32.mrf.mxu0
  %v669 = vadd.f32 %v604, %v668
  %670 = vmatmul.f32.gmra.mxu0 %v502
  %v671 = vpop.f32.mrf.mxu0
  %v672 = vadd.f32 %v607, %v671
  %673 = vmatmul.f32.gmra.mxu0 %v509
  %v674 = vpop.f32.mrf.mxu0
  %v675 = vadd.f32 %v610, %v674
  %676 = vmatmul.f32.gmra.mxu0 %v516
  %v677 = vpop.f32.mrf.mxu0
  %v678 = vadd.f32 %v613, %v677
  %679 = vmatmul.f32.gmra.mxu0 %v523
  %v680 = vpop.f32.mrf.mxu0
  %v681 = vadd.f32 %v616, %v680
  %682 = vmatmul.f32.gmra.mxu0 %v530
  %v683 = vpop.f32.mrf.mxu0
  %v684 = vadd.f32 %v619, %v683
  %685 = vmatmul.f32.gmra.mxu0 %v537
  %v686 = vpop.f32.mrf.mxu0
  %v687 = vadd.f32 %v622, %v686
  %688 = vmatmul.f32.gmra.mxu0 %v544
  %v689 = vpop.f32.mrf.mxu0
  %v690 = vadd.f32 %v625, %v689
  %691 = vmatmul.f32.gmra.mxu0 %v551
  %v692 = vpop.f32.mrf.mxu0
  %v693 = vadd.f32 %v628, %v692
  %694 = vmatmul.f32.gmra.mxu0 %v558
  %v695 = vpop.f32.mrf.mxu0
  %v696 = vadd.f32 %v631, %v695
  %697 = vmatmul.f32.gmra.mxu0 %v565
  %v698 = vpop.f32.mrf.mxu0
  %v699 = vadd.f32 %v634, %v698
  %700 = vdwg.mxu0
  %701 = vmatpush.msra.mxu0 %v329
  %702 = vmatpush.msra.mxu0 %v327
  %703 = vmatpush.msra.mxu0 %v325
  %704 = vmatpush.msra.mxu0 %v323
  %705 = vmatpush.msra.mxu0 %v321
  %706 = vmatpush.msra.mxu0 %v319
  %707 = vmatpush.msra.mxu0 %v317
  %708 = vmatpush.msra.mxu0 %v315
  %709 = vmatpush.msra.mxu0 %v313
  %710 = vmatpush.msra.mxu0 %v311
  %711 = vmatpush.msra.mxu0 %v309
  %712 = vmatpush.msra.mxu0 %v307
  %713 = vmatpush.msra.mxu0 %v305
  %714 = vmatpush.msra.mxu0 %v303
  %715 = vmatpush.msra.mxu0 %v301
  %716 = vmatpush.msra.mxu0 %v299
  %717 = vmatmul.f32.gmra.mxu0 %v461
  %v718 = vpop.f32.mrf.mxu0
  %v719 = vadd.f32 %v654, %v718
  %720 = vmatmul.f32.gmra.mxu0 %v468
  %v721 = vpop.f32.mrf.mxu0
  %v722 = vadd.f32 %v657, %v721
  %723 = vmatmul.f32.gmra.mxu0 %v475
  %v724 = vpop.f32.mrf.mxu0
  %v725 = vadd.f32 %v660, %v724
  %726 = vmatmul.f32.gmra.mxu0 %v482
  %v727 = vpop.f32.mrf.mxu0
  %v728 = vadd.f32 %v663, %v727
  %729 = vmatmul.f32.gmra.mxu0 %v489
  %v730 = vpop.f32.mrf.mxu0
  %v731 = vadd.f32 %v666, %v730
  %732 = vmatmul.f32.gmra.mxu0 %v496
  %v733 = vpop.f32.mrf.mxu0
  %v734 = vadd.f32 %v669, %v733
  %735 = vmatmul.f32.gmra.mxu0 %v503
  %v736 = vpop.f32.mrf.mxu0
  %v737 = vadd.f32 %v672, %v736
  %738 = vmatmul.f32.gmra.mxu0 %v510
  %v739 = vpop.f32.mrf.mxu0
  %v740 = vadd.f32 %v675, %v739
  %741 = vmatmul.f32.gmra.mxu0 %v517
  %v742 = vpop.f32.mrf.mxu0
  %v743 = vadd.f32 %v678, %v742
  %744 = vmatmul.f32.gmra.mxu0 %v524
  %v745 = vpop.f32.mrf.mxu0
  %v746 = vadd.f32 %v681, %v745
  %747 = vmatmul.f32.gmra.mxu0 %v531
  %v748 = vpop.f32.mrf.mxu0
  %v749 = vadd.f32 %v684, %v748
  %750 = vmatmul.f32.gmra.mxu0 %v538
  %v751 = vpop.f32.mrf.mxu0
  %v752 = vadd.f32 %v687, %v751
  %753 = vmatmul.f32.gmra.mxu0 %v545
  %v754 = vpop.f32.mrf.mxu0
  %v755 = vadd.f32 %v690, %v754
  %756 = vmatmul.f32.gmra.mxu0 %v552
  %v757 = vpop.f32.mrf.mxu0
  %v758 = vadd.f32 %v693, %v757
  %759 = vmatmul.f32.gmra.mxu0 %v559
  %v760 = vpop.f32.mrf.mxu0
  %v761 = vadd.f32 %v696, %v760
  %762 = vmatmul.f32.gmra.mxu0 %v566
  %v763 = vpop.f32.mrf.mxu0
  %v764 = vadd.f32 %v699, %v763
  %765 = vdwg.mxu0
  %766 = vmatpush.msra.mxu0 %v361
  %767 = vmatpush.msra.mxu0 %v359
  %768 = vmatpush.msra.mxu0 %v357
  %769 = vmatpush.msra.mxu0 %v355
  %770 = vmatpush.msra.mxu0 %v353
  %771 = vmatpush.msra.mxu0 %v351
  %772 = vmatpush.msra.mxu0 %v349
  %773 = vmatpush.msra.mxu0 %v347
  %774 = vmatpush.msra.mxu0 %v345
  %775 = vmatpush.msra.mxu0 %v343
  %776 = vmatpush.msra.mxu0 %v341
  %777 = vmatpush.msra.mxu0 %v339
  %778 = vmatpush.msra.mxu0 %v337
  %779 = vmatpush.msra.mxu0 %v335
  %780 = vmatpush.msra.mxu0 %v333
  %781 = vmatpush.msra.mxu0 %v331
  %782 = vmatmul.f32.gmra.mxu0 %v462
  %v783 = vpop.f32.mrf.mxu0
  %v784 = vadd.f32 %v719, %v783
  %785 = vmatmul.f32.gmra.mxu0 %v469
  %v786 = vpop.f32.mrf.mxu0
  %v787 = vadd.f32 %v722, %v786
  %788 = vmatmul.f32.gmra.mxu0 %v476
  %v789 = vpop.f32.mrf.mxu0
  %v790 = vadd.f32 %v725, %v789
  %791 = vmatmul.f32.gmra.mxu0 %v483
  %v792 = vpop.f32.mrf.mxu0
  %v793 = vadd.f32 %v728, %v792
  %794 = vmatmul.f32.gmra.mxu0 %v490
  %v795 = vpop.f32.mrf.mxu0
  %v796 = vadd.f32 %v731, %v795
  %797 = vmatmul.f32.gmra.mxu0 %v497
  %v798 = vpop.f32.mrf.mxu0
  %v799 = vadd.f32 %v734, %v798
  %800 = vmatmul.f32.gmra.mxu0 %v504
  %v801 = vpop.f32.mrf.mxu0
  %v802 = vadd.f32 %v737, %v801
  %803 = vmatmul.f32.gmra.mxu0 %v511
  %v804 = vpop.f32.mrf.mxu0
  %v805 = vadd.f32 %v740, %v804
  %806 = vmatmul.f32.gmra.mxu0 %v518
  %v807 = vpop.f32.mrf.mxu0
  %v808 = vadd.f32 %v743, %v807
  %809 = vmatmul.f32.gmra.mxu0 %v525
  %v810 = vpop.f32.mrf.mxu0
  %v811 = vadd.f32 %v746, %v810
  %812 = vmatmul.f32.gmra.mxu0 %v532
  %v813 = vpop.f32.mrf.mxu0
  %v814 = vadd.f32 %v749, %v813
  %815 = vmatmul.f32.gmra.mxu0 %v539
  %v816 = vpop.f32.mrf.mxu0
  %v817 = vadd.f32 %v752, %v816
  %818 = vmatmul.f32.gmra.mxu0 %v546
  %v819 = vpop.f32.mrf.mxu0
  %v820 = vadd.f32 %v755, %v819
  %821 = vmatmul.f32.gmra.mxu0 %v553
  %v822 = vpop.f32.mrf.mxu0
  %v823 = vadd.f32 %v758, %v822
  %824 = vmatmul.f32.gmra.mxu0 %v560
  %v825 = vpop.f32.mrf.mxu0
  %v826 = vadd.f32 %v761, %v825
  %827 = vmatmul.f32.gmra.mxu0 %v567
  %v828 = vpop.f32.mrf.mxu0
  %v829 = vadd.f32 %v764, %v828
  %830 = vdwg.mxu0
  %831 = vmatpush.msra.mxu0 %v393
  %832 = vmatpush.msra.mxu0 %v391
  %833 = vmatpush.msra.mxu0 %v389
  %834 = vmatpush.msra.mxu0 %v387
  %835 = vmatpush.msra.mxu0 %v385
  %836 = vmatpush.msra.mxu0 %v383
  %837 = vmatpush.msra.mxu0 %v381
  %838 = vmatpush.msra.mxu0 %v379
  %839 = vmatpush.msra.mxu0 %v377
  %840 = vmatpush.msra.mxu0 %v375
  %841 = vmatpush.msra.mxu0 %v373
  %842 = vmatpush.msra.mxu0 %v371
  %843 = vmatpush.msra.mxu0 %v369
  %844 = vmatpush.msra.mxu0 %v367
  %845 = vmatpush.msra.mxu0 %v365
  %846 = vmatpush.msra.mxu0 %v363
  %847 = vmatmul.f32.gmra.mxu0 %v463
  %v848 = vpop.f32.mrf.mxu0
  %v849 = vadd.f32 %v784, %v848
  %850 = vmatmul.f32.gmra.mxu0 %v470
  %v851 = vpop.f32.mrf.mxu0
  %v852 = vadd.f32 %v787, %v851
  %853 = vmatmul.f32.gmra.mxu0 %v477
  %v854 = vpop.f32.mrf.mxu0
  %v855 = vadd.f32 %v790, %v854
  %856 = vmatmul.f32.gmra.mxu0 %v484
  %v857 = vpop.f32.mrf.mxu0
  %v858 = vadd.f32 %v793, %v857
  %859 = vmatmul.f32.gmra.mxu0 %v491
  %v860 = vpop.f32.mrf.mxu0
  %v861 = vadd.f32 %v796, %v860
  %862 = vmatmul.f32.gmra.mxu0 %v498
  %v863 = vpop.f32.mrf.mxu0
  %v864 = vadd.f32 %v799, %v863
  %865 = vmatmul.f32.gmra.mxu0 %v505
  %v866 = vpop.f32.mrf.mxu0
  %v867 = vadd.f32 %v802, %v866
  %868 = vmatmul.f32.gmra.mxu0 %v512
  %v869 = vpop.f32.mrf.mxu0
  %v870 = vadd.f32 %v805, %v869
  %871 = vmatmul.f32.gmra.mxu0 %v519
  %v872 = vpop.f32.mrf.mxu0
  %v873 = vadd.f32 %v808, %v872
  %874 = vmatmul.f32.gmra.mxu0 %v526
  %v875 = vpop.f32.mrf.mxu0
  %v876 = vadd.f32 %v811, %v875
  %877 = vmatmul.f32.gmra.mxu0 %v533
  %v878 = vpop.f32.mrf.mxu0
  %v879 = vadd.f32 %v814, %v878
  %880 = vmatmul.f32.gmra.mxu0 %v540
  %v881 = vpop.f32.mrf.mxu0
  %v882 = vadd.f32 %v817, %v881
  %883 = vmatmul.f32.gmra.mxu0 %v547
  %v884 = vpop.f32.mrf.mxu0
  %v885 = vadd.f32 %v820, %v884
  %886 = vmatmul.f32.gmra.mxu0 %v554
  %v887 = vpop.f32.mrf.mxu0
  %v888 = vadd.f32 %v823, %v887
  %889 = vmatmul.f32.gmra.mxu0 %v561
  %v890 = vpop.f32.mrf.mxu0
  %v891 = vadd.f32 %v826, %v890
  %892 = vmatmul.f32.gmra.mxu0 %v568
  %v893 = vpop.f32.mrf.mxu0
  %v894 = vadd.f32 %v829, %v893
  %895 = vdwg.mxu0
  %896 = vmatpush.msra.mxu0 %v425
  %897 = vmatpush.msra.mxu0 %v423
  %898 = vmatpush.msra.mxu0 %v421
  %899 = vmatpush.msra.mxu0 %v419
  %900 = vmatpush.msra.mxu0 %v417
  %901 = vmatpush.msra.mxu0 %v415
  %902 = vmatpush.msra.mxu0 %v413
  %903 = vmatpush.msra.mxu0 %v411
  %904 = vmatpush.msra.mxu0 %v409
  %905 = vmatpush.msra.mxu0 %v407
  %906 = vmatpush.msra.mxu0 %v405
  %907 = vmatpush.msra.mxu0 %v403
  %908 = vmatpush.msra.mxu0 %v401
  %909 = vmatpush.msra.mxu0 %v399
  %910 = vmatpush.msra.mxu0 %v397
  %911 = vmatpush.msra.mxu0 %v395
  %912 = vmatmul.f32.gmra.mxu0 %v464
  %v913 = vpop.f32.mrf.mxu0
  %v914 = vadd.f32 %v849, %v913
  %915 = vmatmul.f32.gmra.mxu0 %v471
  %v916 = vpop.f32.mrf.mxu0
  %v917 = vadd.f32 %v852, %v916
  %918 = vmatmul.f32.gmra.mxu0 %v478
  %v919 = vpop.f32.mrf.mxu0
  %v920 = vadd.f32 %v855, %v919
  %921 = vmatmul.f32.gmra.mxu0 %v485
  %v922 = vpop.f32.mrf.mxu0
  %v923 = vadd.f32 %v858, %v922
  %924 = vmatmul.f32.gmra.mxu0 %v492
  %v925 = vpop.f32.mrf.mxu0
  %v926 = vadd.f32 %v861, %v925
  %927 = vmatmul.f32.gmra.mxu0 %v499
  %v928 = vpop.f32.mrf.mxu0
  %v929 = vadd.f32 %v864, %v928
  %930 = vmatmul.f32.gmra.mxu0 %v506
  %v931 = vpop.f32.mrf.mxu0
  %v932 = vadd.f32 %v867, %v931
  %933 = vmatmul.f32.gmra.mxu0 %v513
  %v934 = vpop.f32.mrf.mxu0
  %v935 = vadd.f32 %v870, %v934
  %936 = vmatmul.f32.gmra.mxu0 %v520
  %v937 = vpop.f32.mrf.mxu0
  %v938 = vadd.f32 %v873, %v937
  %939 = vmatmul.f32.gmra.mxu0 %v527
  %v940 = vpop.f32.mrf.mxu0
  %v941 = vadd.f32 %v876, %v940
  %942 = vmatmul.f32.gmra.mxu0 %v534
  %v943 = vpop.f32.mrf.mxu0
  %v944 = vadd.f32 %v879, %v943
  %945 = vmatmul.f32.gmra.mxu0 %v541
  %v946 = vpop.f32.mrf.mxu0
  %v947 = vadd.f32 %v882, %v946
  %948 = vmatmul.f32.gmra.mxu0 %v548
  %v949 = vpop.f32.mrf.mxu0
  %v950 = vadd.f32 %v885, %v949
  %951 = vmatmul.f32.gmra.mxu0 %v555
  %v952 = vpop.f32.mrf.mxu0
  %v953 = vadd.f32 %v888, %v952
  %954 = vmatmul.f32.gmra.mxu0 %v562
  %v955 = vpop.f32.mrf.mxu0
  %v956 = vadd.f32 %v891, %v955
  %957 = vmatmul.f32.gmra.mxu0 %v569
  %v958 = vpop.f32.mrf.mxu0
  %v959 = vadd.f32 %v894, %v958
  %960 = vdwg.mxu0
  %961 = vmatpush.msra.mxu0 %v457
  %962 = vmatpush.msra.mxu0 %v455
  %963 = vmatpush.msra.mxu0 %v453
  %964 = vmatpush.msra.mxu0 %v451
  %965 = vmatpush.msra.mxu0 %v449
  %966 = vmatpush.msra.mxu0 %v447
  %967 = vmatpush.msra.mxu0 %v445
  %968 = vmatpush.msra.mxu0 %v443
  %969 = vmatpush.msra.mxu0 %v441
  %970 = vmatpush.msra.mxu0 %v439
  %971 = vmatpush.msra.mxu0 %v437
  %972 = vmatpush.msra.mxu0 %v435
  %973 = vmatpush.msra.mxu0 %v433
  %974 = vmatpush.msra.mxu0 %v431
  %975 = vmatpush.msra.mxu0 %v429
  %976 = vmatpush.msra.mxu0 %v427
  %977 = vmatmul.f32.gmra.mxu0 %v465
  %v978 = vpop.f32.mrf.mxu0
  %v979 = vadd.f32 %v914, %v978
  %980 = vmatmul.f32.gmra.mxu0 %v472
  %v981 = vpop.f32.mrf.mxu0
  %v982 = vadd.f32 %v917, %v981
  %983 = vmatmul.f32.gmra.mxu0 %v479
  %v984 = vpop.f32.mrf.mxu0
  %v985 = vadd.f32 %v920, %v984
  %986 = vmatmul.f32.gmra.mxu0 %v486
  %v987 = vpop.f32.mrf.mxu0
  %v988 = vadd.f32 %v923, %v987
  %989 = vmatmul.f32.gmra.mxu0 %v493
  %v990 = vpop.f32.mrf.mxu0
  %v991 = vadd.f32 %v926, %v990
  %992 = vmatmul.f32.gmra.mxu0 %v500
  %v993 = vpop.f32.mrf.mxu0
  %v994 = vadd.f32 %v929, %v993
  %995 = vmatmul.f32.gmra.mxu0 %v507
  %v996 = vpop.f32.mrf.mxu0
  %v997 = vadd.f32 %v932, %v996
  %998 = vmatmul.f32.gmra.mxu0 %v514
  %v999 = vpop.f32.mrf.mxu0
  %v1000 = vadd.f32 %v935, %v999
  %1001 = vmatmul.f32.gmra.mxu0 %v521
  %v1002 = vpop.f32.mrf.mxu0
  %v1003 = vadd.f32 %v938, %v1002
  %1004 = vmatmul.f32.gmra.mxu0 %v528
  %v1005 = vpop.f32.mrf.mxu0
  %v1006 = vadd.f32 %v941, %v1005
  %1007 = vmatmul.f32.gmra.mxu0 %v535
  %v1008 = vpop.f32.mrf.mxu0
  %v1009 = vadd.f32 %v944, %v1008
  %1010 = vmatmul.f32.gmra.mxu0 %v542
  %v1011 = vpop.f32.mrf.mxu0
  %v1012 = vadd.f32 %v947, %v1011
  %1013 = vmatmul.f32.gmra.mxu0 %v549
  %v1014 = vpop.f32.mrf.mxu0
  %v1015 = vadd.f32 %v950, %v1014
  %1016 = vmatmul.f32.gmra.mxu0 %v556
  %v1017 = vpop.f32.mrf.mxu0
  %v1018 = vadd.f32 %v953, %v1017
  %1019 = vmatmul.f32.gmra.mxu0 %v563
  %v1020 = vpop.f32.mrf.mxu0
  %v1021 = vadd.f32 %v956, %v1020
  %1022 = vmatmul.f32.gmra.mxu0 %v570
  %v1023 = vpop.f32.mrf.mxu0
  %v1024 = vadd.f32 %v959, %v1023
  %1025 = vdwg.mxu0
  %1026 = vmatpush.msra.mxu0 %v266
  %1027 = vmatpush.msra.mxu0 %v264
  %1028 = vmatpush.msra.mxu0 %v262
  %1029 = vmatpush.msra.mxu0 %v260
  %1030 = vmatpush.msra.mxu0 %v258
  %1031 = vmatpush.msra.mxu0 %v256
  %1032 = vmatpush.msra.mxu0 %v254
  %1033 = vmatpush.msra.mxu0 %v252
  %1034 = vmatpush.msra.mxu0 %v250
  %1035 = vmatpush.msra.mxu0 %v248
  %1036 = vmatpush.msra.mxu0 %v246
  %1037 = vmatpush.msra.mxu0 %v244
  %1038 = vmatpush.msra.mxu0 %v242
  %1039 = vmatpush.msra.mxu0 %v240
  %1040 = vmatpush.msra.mxu0 %v238
  %1041 = vmatpush.msra.mxu0 %v236
  %1042 = vmatmul.f32.gmra.mxu0 %v459
  %v1043 = vpop.f32.mrf.mxu0
  %v1044 = vadd.f32 0.0, %v1043
  %1045 = vmatmul.f32.gmra.mxu0 %v466
  %v1046 = vpop.f32.mrf.mxu0
  %v1047 = vadd.f32 0.0, %v1046
  %1048 = vmatmul.f32.gmra.mxu0 %v473
  %v1049 = vpop.f32.mrf.mxu0
  %v1050 = vadd.f32 0.0, %v1049
  %1051 = vmatmul.f32.gmra.mxu0 %v480
  %v1052 = vpop.f32.mrf.mxu0
  %v1053 = vadd.f32 0.0, %v1052
  %1054 = vmatmul.f32.gmra.mxu0 %v487
  %v1055 = vpop.f32.mrf.mxu0
  %v1056 = vadd.f32 0.0, %v1055
  %1057 = vmatmul.f32.gmra.mxu0 %v494
  %v1058 = vpop.f32.mrf.mxu0
  %v1059 = vadd.f32 0.0, %v1058
  %1060 = vmatmul.f32.gmra.mxu0 %v501
  %v1061 = vpop.f32.mrf.mxu0
  %v1062 = vadd.f32 0.0, %v1061
  %1063 = vmatmul.f32.gmra.mxu0 %v508
  %v1064 = vpop.f32.mrf.mxu0
  %v1065 = vadd.f32 0.0, %v1064
  %1066 = vmatmul.f32.gmra.mxu0 %v515
  %v1067 = vpop.f32.mrf.mxu0
  %v1068 = vadd.f32 0.0, %v1067
  %1069 = vmatmul.f32.gmra.mxu0 %v522
  %v1070 = vpop.f32.mrf.mxu0
  %v1071 = vadd.f32 0.0, %v1070
  %1072 = vmatmul.f32.gmra.mxu0 %v529
  %v1073 = vpop.f32.mrf.mxu0
  %v1074 = vadd.f32 0.0, %v1073
  %1075 = vmatmul.f32.gmra.mxu0 %v536
  %v1076 = vpop.f32.mrf.mxu0
  %v1077 = vadd.f32 0.0, %v1076
  %1078 = vmatmul.f32.gmra.mxu0 %v543
  %v1079 = vpop.f32.mrf.mxu0
  %v1080 = vadd.f32 0.0, %v1079
  %1081 = vmatmul.f32.gmra.mxu0 %v550
  %v1082 = vpop.f32.mrf.mxu0
  %v1083 = vadd.f32 0.0, %v1082
  %1084 = vmatmul.f32.gmra.mxu0 %v557
  %v1085 = vpop.f32.mrf.mxu0
  %v1086 = vadd.f32 0.0, %v1085
  %1087 = vmatmul.f32.gmra.mxu0 %v564
  %v1088 = vpop.f32.mrf.mxu0
  %v1089 = vadd.f32 0.0, %v1088
  %1090 = vdwg.mxu0
  %1091 = vmatpush.msra.mxu0 %v298
  %1092 = vmatpush.msra.mxu0 %v296
  %1093 = vmatpush.msra.mxu0 %v294
  %1094 = vmatpush.msra.mxu0 %v292
  %1095 = vmatpush.msra.mxu0 %v290
  %1096 = vmatpush.msra.mxu0 %v288
  %1097 = vmatpush.msra.mxu0 %v286
  %1098 = vmatpush.msra.mxu0 %v284
  %1099 = vmatpush.msra.mxu0 %v282
  %1100 = vmatpush.msra.mxu0 %v280
  %1101 = vmatpush.msra.mxu0 %v278
  %1102 = vmatpush.msra.mxu0 %v276
  %1103 = vmatpush.msra.mxu0 %v274
  %1104 = vmatpush.msra.mxu0 %v272
  %1105 = vmatpush.msra.mxu0 %v270
  %1106 = vmatpush.msra.mxu0 %v268
  %1107 = vmatmul.f32.gmra.mxu0 %v460
  %v1108 = vpop.f32.mrf.mxu0
  %v1109 = vadd.f32 %v1044, %v1108
  %1110 = vmatmul.f32.gmra.mxu0 %v467
  %v1111 = vpop.f32.mrf.mxu0
  %v1112 = vadd.f32 %v1047, %v1111
  %1113 = vmatmul.f32.gmra.mxu0 %v474
  %v1114 = vpop.f32.mrf.mxu0
  %v1115 = vadd.f32 %v1050, %v1114
  %1116 = vmatmul.f32.gmra.mxu0 %v481
  %v1117 = vpop.f32.mrf.mxu0
  %v1118 = vadd.f32 %v1053, %v1117
  %1119 = vmatmul.f32.gmra.mxu0 %v488
  %v1120 = vpop.f32.mrf.mxu0
  %v1121 = vadd.f32 %v1056, %v1120
  %1122 = vmatmul.f32.gmra.mxu0 %v495
  %v1123 = vpop.f32.mrf.mxu0
  %v1124 = vadd.f32 %v1059, %v1123
  %1125 = vmatmul.f32.gmra.mxu0 %v502
  %v1126 = vpop.f32.mrf.mxu0
  %v1127 = vadd.f32 %v1062, %v1126
  %1128 = vmatmul.f32.gmra.mxu0 %v509
  %v1129 = vpop.f32.mrf.mxu0
  %v1130 = vadd.f32 %v1065, %v1129
  %1131 = vmatmul.f32.gmra.mxu0 %v516
  %v1132 = vpop.f32.mrf.mxu0
  %v1133 = vadd.f32 %v1068, %v1132
  %1134 = vmatmul.f32.gmra.mxu0 %v523
  %v1135 = vpop.f32.mrf.mxu0
  %v1136 = vadd.f32 %v1071, %v1135
  %1137 = vmatmul.f32.gmra.mxu0 %v530
  %v1138 = vpop.f32.mrf.mxu0
  %v1139 = vadd.f32 %v1074, %v1138
  %1140 = vmatmul.f32.gmra.mxu0 %v537
  %v1141 = vpop.f32.mrf.mxu0
  %v1142 = vadd.f32 %v1077, %v1141
  %1143 = vmatmul.f32.gmra.mxu0 %v544
  %v1144 = vpop.f32.mrf.mxu0
  %v1145 = vadd.f32 %v1080, %v1144
  %1146 = vmatmul.f32.gmra.mxu0 %v551
  %v1147 = vpop.f32.mrf.mxu0
  %v1148 = vadd.f32 %v1083, %v1147
  %1149 = vmatmul.f32.gmra.mxu0 %v558
  %v1150 = vpop.f32.mrf.mxu0
  %v1151 = vadd.f32 %v1086, %v1150
  %1152 = vmatmul.f32.gmra.mxu0 %v565
  %v1153 = vpop.f32.mrf.mxu0
  %v1154 = vadd.f32 %v1089, %v1153
  %1155 = vdwg.mxu0
  %1156 = vmatpush.msra.mxu0 %v330
  %1157 = vmatpush.msra.mxu0 %v328
  %1158 = vmatpush.msra.mxu0 %v326
  %1159 = vmatpush.msra.mxu0 %v324
  %1160 = vmatpush.msra.mxu0 %v322
  %1161 = vmatpush.msra.mxu0 %v320
  %1162 = vmatpush.msra.mxu0 %v318
  %1163 = vmatpush.msra.mxu0 %v316
  %1164 = vmatpush.msra.mxu0 %v314
  %1165 = vmatpush.msra.mxu0 %v312
  %1166 = vmatpush.msra.mxu0 %v310
  %1167 = vmatpush.msra.mxu0 %v308
  %1168 = vmatpush.msra.mxu0 %v306
  %1169 = vmatpush.msra.mxu0 %v304
  %1170 = vmatpush.msra.mxu0 %v302
  %1171 = vmatpush.msra.mxu0 %v300
  %1172 = vmatmul.f32.gmra.mxu0 %v461
  %v1173 = vpop.f32.mrf.mxu0
  %v1174 = vadd.f32 %v1109, %v1173
  %1175 = vmatmul.f32.gmra.mxu0 %v468
  %v1176 = vpop.f32.mrf.mxu0
  %v1177 = vadd.f32 %v1112, %v1176
  %1178 = vmatmul.f32.gmra.mxu0 %v475
  %v1179 = vpop.f32.mrf.mxu0
  %v1180 = vadd.f32 %v1115, %v1179
  %1181 = vmatmul.f32.gmra.mxu0 %v482
  %v1182 = vpop.f32.mrf.mxu0
  %v1183 = vadd.f32 %v1118, %v1182
  %1184 = vmatmul.f32.gmra.mxu0 %v489
  %v1185 = vpop.f32.mrf.mxu0
  %v1186 = vadd.f32 %v1121, %v1185
  %1187 = vmatmul.f32.gmra.mxu0 %v496
  %v1188 = vpop.f32.mrf.mxu0
  %v1189 = vadd.f32 %v1124, %v1188
  %1190 = vmatmul.f32.gmra.mxu0 %v503
  %v1191 = vpop.f32.mrf.mxu0
  %v1192 = vadd.f32 %v1127, %v1191
  %1193 = vmatmul.f32.gmra.mxu0 %v510
  %v1194 = vpop.f32.mrf.mxu0
  %v1195 = vadd.f32 %v1130, %v1194
  %1196 = vmatmul.f32.gmra.mxu0 %v517
  %v1197 = vpop.f32.mrf.mxu0
  %v1198 = vadd.f32 %v1133, %v1197
  %1199 = vmatmul.f32.gmra.mxu0 %v524
  %v1200 = vpop.f32.mrf.mxu0
  %v1201 = vadd.f32 %v1136, %v1200
  %1202 = vmatmul.f32.gmra.mxu0 %v531
  %v1203 = vpop.f32.mrf.mxu0
  %v1204 = vadd.f32 %v1139, %v1203
  %1205 = vmatmul.f32.gmra.mxu0 %v538
  %v1206 = vpop.f32.mrf.mxu0
  %v1207 = vadd.f32 %v1142, %v1206
  %1208 = vmatmul.f32.gmra.mxu0 %v545
  %v1209 = vpop.f32.mrf.mxu0
  %v1210 = vadd.f32 %v1145, %v1209
  %1211 = vmatmul.f32.gmra.mxu0 %v552
  %v1212 = vpop.f32.mrf.mxu0
  %v1213 = vadd.f32 %v1148, %v1212
  %1214 = vmatmul.f32.gmra.mxu0 %v559
  %v1215 = vpop.f32.mrf.mxu0
  %v1216 = vadd.f32 %v1151, %v1215
  %1217 = vmatmul.f32.gmra.mxu0 %v566
  %v1218 = vpop.f32.mrf.mxu0
  %v1219 = vadd.f32 %v1154, %v1218
  %1220 = vdwg.mxu0
  %1221 = vmatpush.msra.mxu0 %v362
  %1222 = vmatpush.msra.mxu0 %v360
  %1223 = vmatpush.msra.mxu0 %v358
  %1224 = vmatpush.msra.mxu0 %v356
  %1225 = vmatpush.msra.mxu0 %v354
  %1226 = vmatpush.msra.mxu0 %v352
  %1227 = vmatpush.msra.mxu0 %v350
  %1228 = vmatpush.msra.mxu0 %v348
  %1229 = vmatpush.msra.mxu0 %v346
  %1230 = vmatpush.msra.mxu0 %v344
  %1231 = vmatpush.msra.mxu0 %v342
  %1232 = vmatpush.msra.mxu0 %v340
  %1233 = vmatpush.msra.mxu0 %v338
  %1234 = vmatpush.msra.mxu0 %v336
  %1235 = vmatpush.msra.mxu0 %v334
  %1236 = vmatpush.msra.mxu0 %v332
  %1237 = vmatmul.f32.gmra.mxu0 %v462
  %v1238 = vpop.f32.mrf.mxu0
  %v1239 = vadd.f32 %v1174, %v1238
  %1240 = vmatmul.f32.gmra.mxu0 %v469
  %v1241 = vpop.f32.mrf.mxu0
  %v1242 = vadd.f32 %v1177, %v1241
  %1243 = vmatmul.f32.gmra.mxu0 %v476
  %v1244 = vpop.f32.mrf.mxu0
  %v1245 = vadd.f32 %v1180, %v1244
  %1246 = vmatmul.f32.gmra.mxu0 %v483
  %v1247 = vpop.f32.mrf.mxu0
  %v1248 = vadd.f32 %v1183, %v1247
  %1249 = vmatmul.f32.gmra.mxu0 %v490
  %v1250 = vpop.f32.mrf.mxu0
  %v1251 = vadd.f32 %v1186, %v1250
  %1252 = vmatmul.f32.gmra.mxu0 %v497
  %v1253 = vpop.f32.mrf.mxu0
  %v1254 = vadd.f32 %v1189, %v1253
  %1255 = vmatmul.f32.gmra.mxu0 %v504
  %v1256 = vpop.f32.mrf.mxu0
  %v1257 = vadd.f32 %v1192, %v1256
  %1258 = vmatmul.f32.gmra.mxu0 %v511
  %v1259 = vpop.f32.mrf.mxu0
  %v1260 = vadd.f32 %v1195, %v1259
  %1261 = vmatmul.f32.gmra.mxu0 %v518
  %v1262 = vpop.f32.mrf.mxu0
  %v1263 = vadd.f32 %v1198, %v1262
  %1264 = vmatmul.f32.gmra.mxu0 %v525
  %v1265 = vpop.f32.mrf.mxu0
  %v1266 = vadd.f32 %v1201, %v1265
  %1267 = vmatmul.f32.gmra.mxu0 %v532
  %v1268 = vpop.f32.mrf.mxu0
  %v1269 = vadd.f32 %v1204, %v1268
  %1270 = vmatmul.f32.gmra.mxu0 %v539
  %v1271 = vpop.f32.mrf.mxu0
  %v1272 = vadd.f32 %v1207, %v1271
  %1273 = vmatmul.f32.gmra.mxu0 %v546
  %v1274 = vpop.f32.mrf.mxu0
  %v1275 = vadd.f32 %v1210, %v1274
  %1276 = vmatmul.f32.gmra.mxu0 %v553
  %v1277 = vpop.f32.mrf.mxu0
  %v1278 = vadd.f32 %v1213, %v1277
  %1279 = vmatmul.f32.gmra.mxu0 %v560
  %v1280 = vpop.f32.mrf.mxu0
  %v1281 = vadd.f32 %v1216, %v1280
  %1282 = vmatmul.f32.gmra.mxu0 %v567
  %v1283 = vpop.f32.mrf.mxu0
  %v1284 = vadd.f32 %v1219, %v1283
  %1285 = vdwg.mxu0
  %1286 = vmatpush.msra.mxu0 %v394
  %1287 = vmatpush.msra.mxu0 %v392
  %1288 = vmatpush.msra.mxu0 %v390
  %1289 = vmatpush.msra.mxu0 %v388
  %1290 = vmatpush.msra.mxu0 %v386
  %1291 = vmatpush.msra.mxu0 %v384
  %1292 = vmatpush.msra.mxu0 %v382
  %1293 = vmatpush.msra.mxu0 %v380
  %1294 = vmatpush.msra.mxu0 %v378
  %1295 = vmatpush.msra.mxu0 %v376
  %1296 = vmatpush.msra.mxu0 %v374
  %1297 = vmatpush.msra.mxu0 %v372
  %1298 = vmatpush.msra.mxu0 %v370
  %1299 = vmatpush.msra.mxu0 %v368
  %1300 = vmatpush.msra.mxu0 %v366
  %1301 = vmatpush.msra.mxu0 %v364
  %1302 = vmatmul.f32.gmra.mxu0 %v463
  %v1303 = vpop.f32.mrf.mxu0
  %v1304 = vadd.f32 %v1239, %v1303
  %1305 = vmatmul.f32.gmra.mxu0 %v470
  %v1306 = vpop.f32.mrf.mxu0
  %v1307 = vadd.f32 %v1242, %v1306
  %1308 = vmatmul.f32.gmra.mxu0 %v477
  %v1309 = vpop.f32.mrf.mxu0
  %v1310 = vadd.f32 %v1245, %v1309
  %1311 = vmatmul.f32.gmra.mxu0 %v484
  %v1312 = vpop.f32.mrf.mxu0
  %v1313 = vadd.f32 %v1248, %v1312
  %1314 = vmatmul.f32.gmra.mxu0 %v491
  %v1315 = vpop.f32.mrf.mxu0
  %v1316 = vadd.f32 %v1251, %v1315
  %1317 = vmatmul.f32.gmra.mxu0 %v498
  %v1318 = vpop.f32.mrf.mxu0
  %v1319 = vadd.f32 %v1254, %v1318
  %1320 = vmatmul.f32.gmra.mxu0 %v505
  %v1321 = vpop.f32.mrf.mxu0
  %v1322 = vadd.f32 %v1257, %v1321
  %1323 = vmatmul.f32.gmra.mxu0 %v512
  %v1324 = vpop.f32.mrf.mxu0
  %v1325 = vadd.f32 %v1260, %v1324
  %1326 = vmatmul.f32.gmra.mxu0 %v519
  %v1327 = vpop.f32.mrf.mxu0
  %v1328 = vadd.f32 %v1263, %v1327
  %1329 = vmatmul.f32.gmra.mxu0 %v526
  %v1330 = vpop.f32.mrf.mxu0
  %v1331 = vadd.f32 %v1266, %v1330
  %1332 = vmatmul.f32.gmra.mxu0 %v533
  %v1333 = vpop.f32.mrf.mxu0
  %v1334 = vadd.f32 %v1269, %v1333
  %1335 = vmatmul.f32.gmra.mxu0 %v540
  %v1336 = vpop.f32.mrf.mxu0
  %v1337 = vadd.f32 %v1272, %v1336
  %1338 = vmatmul.f32.gmra.mxu0 %v547
  %v1339 = vpop.f32.mrf.mxu0
  %v1340 = vadd.f32 %v1275, %v1339
  %1341 = vmatmul.f32.gmra.mxu0 %v554
  %v1342 = vpop.f32.mrf.mxu0
  %v1343 = vadd.f32 %v1278, %v1342
  %1344 = vmatmul.f32.gmra.mxu0 %v561
  %v1345 = vpop.f32.mrf.mxu0
  %v1346 = vadd.f32 %v1281, %v1345
  %1347 = vmatmul.f32.gmra.mxu0 %v568
  %v1348 = vpop.f32.mrf.mxu0
  %v1349 = vadd.f32 %v1284, %v1348
  %1350 = vdwg.mxu0
  %1351 = vmatpush.msra.mxu0 %v426
  %1352 = vmatpush.msra.mxu0 %v424
  %1353 = vmatpush.msra.mxu0 %v422
  %1354 = vmatpush.msra.mxu0 %v420
  %1355 = vmatpush.msra.mxu0 %v418
  %1356 = vmatpush.msra.mxu0 %v416
  %1357 = vmatpush.msra.mxu0 %v414
  %1358 = vmatpush.msra.mxu0 %v412
  %1359 = vmatpush.msra.mxu0 %v410
  %1360 = vmatpush.msra.mxu0 %v408
  %1361 = vmatpush.msra.mxu0 %v406
  %1362 = vmatpush.msra.mxu0 %v404
  %1363 = vmatpush.msra.mxu0 %v402
  %1364 = vmatpush.msra.mxu0 %v400
  %1365 = vmatpush.msra.mxu0 %v398
  %1366 = vmatpush.msra.mxu0 %v396
  %1367 = vmatmul.f32.gmra.mxu0 %v464
  %v1368 = vpop.f32.mrf.mxu0
  %v1369 = vadd.f32 %v1304, %v1368
  %1370 = vmatmul.f32.gmra.mxu0 %v471
  %v1371 = vpop.f32.mrf.mxu0
  %v1372 = vadd.f32 %v1307, %v1371
  %1373 = vmatmul.f32.gmra.mxu0 %v478
  %v1374 = vpop.f32.mrf.mxu0
  %v1375 = vadd.f32 %v1310, %v1374
  %1376 = vmatmul.f32.gmra.mxu0 %v485
  %v1377 = vpop.f32.mrf.mxu0
  %v1378 = vadd.f32 %v1313, %v1377
  %1379 = vmatmul.f32.gmra.mxu0 %v492
  %v1380 = vpop.f32.mrf.mxu0
  %v1381 = vadd.f32 %v1316, %v1380
  %1382 = vmatmul.f32.gmra.mxu0 %v499
  %v1383 = vpop.f32.mrf.mxu0
  %v1384 = vadd.f32 %v1319, %v1383
  %1385 = vmatmul.f32.gmra.mxu0 %v506
  %v1386 = vpop.f32.mrf.mxu0
  %v1387 = vadd.f32 %v1322, %v1386
  %1388 = vmatmul.f32.gmra.mxu0 %v513
  %v1389 = vpop.f32.mrf.mxu0
  %v1390 = vadd.f32 %v1325, %v1389
  %1391 = vmatmul.f32.gmra.mxu0 %v520
  %v1392 = vpop.f32.mrf.mxu0
  %v1393 = vadd.f32 %v1328, %v1392
  %1394 = vmatmul.f32.gmra.mxu0 %v527
  %v1395 = vpop.f32.mrf.mxu0
  %v1396 = vadd.f32 %v1331, %v1395
  %1397 = vmatmul.f32.gmra.mxu0 %v534
  %v1398 = vpop.f32.mrf.mxu0
  %v1399 = vadd.f32 %v1334, %v1398
  %1400 = vmatmul.f32.gmra.mxu0 %v541
  %v1401 = vpop.f32.mrf.mxu0
  %v1402 = vadd.f32 %v1337, %v1401
  %1403 = vmatmul.f32.gmra.mxu0 %v548
  %v1404 = vpop.f32.mrf.mxu0
  %v1405 = vadd.f32 %v1340, %v1404
  %1406 = vmatmul.f32.gmra.mxu0 %v555
  %v1407 = vpop.f32.mrf.mxu0
  %v1408 = vadd.f32 %v1343, %v1407
  %1409 = vmatmul.f32.gmra.mxu0 %v562
  %v1410 = vpop.f32.mrf.mxu0
  %v1411 = vadd.f32 %v1346, %v1410
  %1412 = vmatmul.f32.gmra.mxu0 %v569
  %v1413 = vpop.f32.mrf.mxu0
  %v1414 = vadd.f32 %v1349, %v1413
  %1415 = vdwg.mxu0
  %1416 = vmatpush.msra.mxu0 %v458
  %1417 = vmatpush.msra.mxu0 %v456
  %1418 = vmatpush.msra.mxu0 %v454
  %1419 = vmatpush.msra.mxu0 %v452
  %1420 = vmatpush.msra.mxu0 %v450
  %1421 = vmatpush.msra.mxu0 %v448
  %1422 = vmatpush.msra.mxu0 %v446
  %1423 = vmatpush.msra.mxu0 %v444
  %1424 = vmatpush.msra.mxu0 %v442
  %1425 = vmatpush.msra.mxu0 %v440
  %1426 = vmatpush.msra.mxu0 %v438
  %1427 = vmatpush.msra.mxu0 %v436
  %1428 = vmatpush.msra.mxu0 %v434
  %1429 = vmatpush.msra.mxu0 %v432
  %1430 = vmatpush.msra.mxu0 %v430
  %1431 = vmatpush.msra.mxu0 %v428
  %1432 = vmatmul.f32.gmra.mxu0 %v465
  %v1433 = vpop.f32.mrf.mxu0
  %v1434 = vadd.f32 %v1369, %v1433
  %1435 = vmatmul.f32.gmra.mxu0 %v472
  %v1436 = vpop.f32.mrf.mxu0
  %v1437 = vadd.f32 %v1372, %v1436
  %1438 = vmatmul.f32.gmra.mxu0 %v479
  %v1439 = vpop.f32.mrf.mxu0
  %v1440 = vadd.f32 %v1375, %v1439
  %1441 = vmatmul.f32.gmra.mxu0 %v486
  %v1442 = vpop.f32.mrf.mxu0
  %v1443 = vadd.f32 %v1378, %v1442
  %1444 = vmatmul.f32.gmra.mxu0 %v493
  %v1445 = vpop.f32.mrf.mxu0
  %v1446 = vadd.f32 %v1381, %v1445
  %1447 = vmatmul.f32.gmra.mxu0 %v500
  %v1448 = vpop.f32.mrf.mxu0
  %v1449 = vadd.f32 %v1384, %v1448
  %1450 = vmatmul.f32.gmra.mxu0 %v507
  %v1451 = vpop.f32.mrf.mxu0
  %v1452 = vadd.f32 %v1387, %v1451
  %1453 = vmatmul.f32.gmra.mxu0 %v514
  %v1454 = vpop.f32.mrf.mxu0
  %v1455 = vadd.f32 %v1390, %v1454
  %1456 = vmatmul.f32.gmra.mxu0 %v521
  %v1457 = vpop.f32.mrf.mxu0
  %v1458 = vadd.f32 %v1393, %v1457
  %1459 = vmatmul.f32.gmra.mxu0 %v528
  %v1460 = vpop.f32.mrf.mxu0
  %v1461 = vadd.f32 %v1396, %v1460
  %1462 = vmatmul.f32.gmra.mxu0 %v535
  %v1463 = vpop.f32.mrf.mxu0
  %v1464 = vadd.f32 %v1399, %v1463
  %1465 = vmatmul.f32.gmra.mxu0 %v542
  %v1466 = vpop.f32.mrf.mxu0
  %v1467 = vadd.f32 %v1402, %v1466
  %1468 = vmatmul.f32.gmra.mxu0 %v549
  %v1469 = vpop.f32.mrf.mxu0
  %v1470 = vadd.f32 %v1405, %v1469
  %1471 = vmatmul.f32.gmra.mxu0 %v556
  %v1472 = vpop.f32.mrf.mxu0
  %v1473 = vadd.f32 %v1408, %v1472
  %1474 = vmatmul.f32.gmra.mxu0 %v563
  %v1475 = vpop.f32.mrf.mxu0
  %v1476 = vadd.f32 %v1411, %v1475
  %1477 = vmatmul.f32.gmra.mxu0 %v570
  %v1478 = vpop.f32.mrf.mxu0
  %v1479 = vadd.f32 %v1414, %v1478
  %1480 = vdwg.mxu0
  %1481 = vst [vmem:[%s2] sm:$0xff] %v979
  %vm1482 = vcmask 556032
  %1483 = vst.msk [vmem:[%s2 + $0x8] sm:$0xff] %vm1482, %v1434
  %1484 = vst [vmem:[%s2 + $0x10] sm:$0xff] %v982
  %1485 = vst.msk [vmem:[%s2 + $0x18] sm:$0xff] %vm1482, %v1437
  %1486 = vst [vmem:[%s2 + $0x20] sm:$0xff] %v985
  %1487 = vst.msk [vmem:[%s2 + $0x28] sm:$0xff] %vm1482, %v1440
  %1488 = vst [vmem:[%s2 + $0x30] sm:$0xff] %v988
  %1489 = vst.msk [vmem:[%s2 + $0x38] sm:$0xff] %vm1482, %v1443
  %1490 = vst [vmem:[%s2 + $0x40] sm:$0xff] %v991
  %1491 = vst.msk [vmem:[%s2 + $0x48] sm:$0xff] %vm1482, %v1446
  %1492 = vst [vmem:[%s2 + $0x50] sm:$0xff] %v994
  %1493 = vst.msk [vmem:[%s2 + $0x58] sm:$0xff] %vm1482, %v1449
  %1494 = vst [vmem:[%s2 + $0x60] sm:$0xff] %v997
  %1495 = vst.msk [vmem:[%s2 + $0x68] sm:$0xff] %vm1482, %v1452
  %1496 = vst [vmem:[%s2 + $0x70] sm:$0xff] %v1000
  %1497 = vst.msk [vmem:[%s2 + $0x78] sm:$0xff] %vm1482, %v1455
  %1498 = vst [vmem:[%s2 + $0x80] sm:$0xff] %v1003
  %1499 = vst.msk [vmem:[%s2 + $0x88] sm:$0xff] %vm1482, %v1458
  %1500 = vst [vmem:[%s2 + $0x90] sm:$0xff] %v1006
  %1501 = vst.msk [vmem:[%s2 + $0x98] sm:$0xff] %vm1482, %v1461
  %1502 = vst [vmem:[%s2 + $0xa0] sm:$0xff] %v1009
  %1503 = vst.msk [vmem:[%s2 + $0xa8] sm:$0xff] %vm1482, %v1464
  %1504 = vst [vmem:[%s2 + $0xb0] sm:$0xff] %v1012
  %1505 = vst.msk [vmem:[%s2 + $0xb8] sm:$0xff] %vm1482, %v1467
  %1506 = vst [vmem:[%s2 + $0xc0] sm:$0xff] %v1015
  %1507 = vst.msk [vmem:[%s2 + $0xc8] sm:$0xff] %vm1482, %v1470
  %1508 = vst [vmem:[%s2 + $0xd0] sm:$0xff] %v1018
  %1509 = vst.msk [vmem:[%s2 + $0xd8] sm:$0xff] %vm1482, %v1473
  %1510 = vst [vmem:[%s2 + $0xe0] sm:$0xff] %v1021
  %1511 = vst.msk [vmem:[%s2 + $0xe8] sm:$0xff] %vm1482, %v1476
  %1512 = vst [vmem:[%s2 + $0xf0] sm:$0xff] %v1024
  %1513 = vst.msk [vmem:[%s2 + $0xf8] sm:$0xff] %vm1482, %v1479
  // Predicated region
  $region10: #{tpu_custom_call.1} parent=0 // pred_check
    _
  $region11: #{tpu_custom_call.1} parent=0 // pred_check_branch
    %1515 = sbr.rel (0) target = $region13
  $region12: #{tpu_custom_call.1} parent=0 // pred_region
    _
  $region13: #{tpu_custom_call.1} parent=0 // pred_fallthru
    _
  // Predicated region
  $region14: #{tpu_custom_call.1} parent=0 // pred_check
    _
  $region15: #{tpu_custom_call.1} parent=0 // pred_check_branch
    %1517 = sbr.rel (0) target = $region17
  $region16: #{tpu_custom_call.1} parent=0 // pred_region
    _
  $region17: #{tpu_custom_call.1} parent=0 // pred_fallthru
    _

</llo_original>
